<compile_context>
chip_gen: v7x
topology: tpu7x:2x2x1
jax: 0.10.0
libtpu: 0.0.40
codegen_flags: <defaults>
</compile_context>

<pallas_src>
import jax
import jax.numpy as jnp
from jax.experimental import pallas as pl
from jax.experimental.pallas import tpu as pltpu

LANE = 128              # vreg lane width: packed column widths are multiples of this
MIB = 1024 * 1024


def _round_up(x, m):
    return (x + m - 1) // m * m


def _row_tile():
    """Per-generation row/contraction tile for the streamed adjacency matmuls:
    1024 on 128 MiB-VMEM parts (v5e/v6e), 512 on v7x's 64 MiB."""
    try:
        vmem = pltpu.get_tpu_info().vmem_capacity_bytes
        return 1024 if vmem >= 100 * MIB else 512
    except Exception:   # conservative fallback if the trace-time query is unavailable
        return 512


def _pick_k_tile(k, row_tile):
    if k <= row_tile:
        return k                       # single reduction step (k is a multiple of 128)
    for t in (row_tile, 512, 256, 128):
        if k % t == 0:
            return t
    return 128


# ------------------------------ generic fused matmul kernel ------------------------------ #

def _make_matmul_kernel(has_bias, has_prologue):
    """acc += relu(A*scale + shift)(bf16) @ W ; at the last K step: out = acc [+ bias]."""

    def kernel(*refs):
        idx = 0
        a_ref = refs[idx]; idx += 1
        w_ref = refs[idx]; idx += 1
        b_ref = s_ref = t_ref = None
        if has_bias:
            b_ref = refs[idx]; idx += 1
        if has_prologue:
            s_ref, t_ref = refs[idx], refs[idx + 1]; idx += 2
        o_ref, acc_ref = refs[idx], refs[idx + 1]

        k = pl.program_id(1)

        @pl.when(k == 0)
        def _init():
            acc_ref[...] = jnp.zeros_like(acc_ref)

        a = a_ref[...]
        if has_prologue:
            # Folded eval-BatchNorm + ReLU of the previous layer's cat, applied on the
            # input tile (f32 VPU) then cast back to bf16 for the MXU.  Pad lanes have
            # scale = shift = 0, so they stay exactly zero.
            a = jnp.maximum(a.astype(jnp.float32) * s_ref[...] + t_ref[...], 0.0)
        a = a.astype(jnp.bfloat16)
        acc_ref[...] += jnp.dot(a, w_ref[...], preferred_element_type=jnp.float32)

        @pl.when(k == pl.num_programs(1) - 1)
        def _finalize():
            r = acc_ref[...]
            if has_bias:
                r = r + b_ref[...]
            o_ref[...] = r.astype(o_ref.dtype)

    return kernel


def _fused_matmul(a, w, *, bias=None, scale=None, shift=None,
                  out_dtype=jnp.bfloat16, row_tile=512):
    """out = relu(a*scale + shift) @ w [+ bias], row-tiled + K-tiled.

    Row axis is 'parallel' (v7x megacore + BlockSpec pipeline), contraction axis is
    'arbitrary' with an f32 VMEM accumulator.  a/w ride the MXU in bf16."""
    m, k = a.shape
    k2, c = w.shape
    assert k == k2, (k, k2)
    tm = row_tile
    assert m % tm == 0, (m, tm)
    tk = _pick_k_tile(k, row_tile)
    assert k % tk == 0, (k, tk)
    nm, nk = m // tm, k // tk

    has_bias = bias is not None
    has_prologue = scale is not None

    in_specs = [pl.BlockSpec((tm, tk), lambda i, kk: (i, kk)),
                pl.BlockSpec((tk, c), lambda i, kk: (kk, 0))]
    inputs = [a, w]
    if has_bias:
        in_specs.append(pl.BlockSpec((1, c), lambda i, kk: (0, 0)))
        inputs.append(bias)
    if has_prologue:
        in_specs += [pl.BlockSpec((1, tk), lambda i, kk: (0, kk)),
                     pl.BlockSpec((1, tk), lambda i, kk: (0, kk))]
        inputs += [scale, shift]

    out_isz = jnp.dtype(out_dtype).itemsize
    # Double-buffered VMEM footprint of this call + headroom, capped below v7x's 64 MiB.
    footprint = (2 * tm * tk * a.dtype.itemsize + 2 * tk * c * w.dtype.itemsize
                 + 2 * tm * c * out_isz + tm * c * 4 + 4 * (c + 2 * tk) * 4)
    vmem_limit = int(min(64 * MIB, max(32 * MIB, footprint + 16 * MIB)))

    cost = pl.CostEstimate(
        flops=int(2 * m * k * c + 3 * m * c),
        transcendentals=0,
        bytes_accessed=int(m * k * a.dtype.itemsize + nm * k * c * w.dtype.itemsize
                           + m * c * out_isz))

    return pl.pallas_call(
        _make_matmul_kernel(has_bias, has_prologue),
        out_shape=jax.ShapeDtypeStruct((m, c), out_dtype),
        grid=(nm, nk),
        in_specs=in_specs,
        out_specs=pl.BlockSpec((tm, c), lambda i, kk: (i, 0)),
        scratch_shapes=[pltpu.VMEM((tm, c), jnp.float32)],
        compiler_params=pltpu.CompilerParams(
            dimension_semantics=("parallel", "arbitrary"),
            vmem_limit_bytes=vmem_limit),
        cost_estimate=cost,
    )(*inputs)


# ------------------------------------ MixHop forward ------------------------------------- #

def mixhop_forward(x, adj_t, packed, hops=2):
    """Eval-mode MixHop forward.  x: [N, in] f32, adj_t: [N, N] f32 (dense, GCN-normalized,
    transposed).  All heavy math runs in the tiled Pallas matmul kernel above."""
    n, in_ch = x.shape
    convs, bns = packed["convs"], packed["bns"]
    wf, bf = packed["final"]
    out_ch = packed["out_channels"]

    row_tile = _row_tile()
    n_pad = _round_up(max(n, 1), row_tile)
    in_pad = convs[0][0].shape[0]

    adj = jnp.zeros((n_pad, n_pad), jnp.bfloat16).at[:n, :n].set(adj_t.astype(jnp.bfloat16))
    act = jnp.zeros((n_pad, in_pad), jnp.bfloat16).at[:n, :in_ch].set(x.astype(jnp.bfloat16))

    scale = shift = None
    for li, (w_cat, b_cat, out_w) in enumerate(convs):
        # Projection for all hops in one wide MXU matmul; BN + ReLU of the previous
        # layer's cat ride as this matmul's prologue (first layer: no prologue).
        h = _fused_matmul(act, w_cat, bias=b_cat, scale=scale, shift=shift,
                          out_dtype=jnp.bfloat16, row_tile=row_tile)
        parts = [h[:, :out_w]]                      # hop 0
        if hops >= 1:
            # Shared adjacency propagation on the packed [hop1|..|hopH] slab — only
            # round_up(hops*out_w, 128) lanes wide (NOT 128 per hop).  Hop j is peeled
            # from the slab after its j-th A_t application.
            slab_w = hops * out_w
            slab_pad = _round_up(slab_w, LANE)
            slab = jnp.zeros((n_pad, slab_pad), jnp.bfloat16).at[:, :slab_w].set(
                h[:, out_w:out_w + slab_w])
            for j in range(1, hops + 1):
                # TODO(synk): when hops*out_w spans multiple 128-lane tiles, drop the
                # already-peeled columns between steps to save whole MXU tiles.
                slab = _fused_matmul(adj, slab, out_dtype=jnp.bfloat16, row_tile=row_tile)
                parts.append(slab[:, (j - 1) * out_w:j * out_w])
        cat_w = (hops + 1) * out_w
        cat_pad = _round_up(cat_w, LANE)
        act = jnp.zeros((n_pad, cat_pad), jnp.bfloat16).at[:, :cat_w].set(
            jnp.concatenate(parts, axis=1))
        if li < len(convs) - 1:
            scale, shift = bns[li]    # folded eval-BN, applied in the next projection
            # TODO(synk): dropout is identity in eval mode (training path not implemented).
        else:
            scale = shift = None

    out = _fused_matmul(act, wf, bias=bf, out_dtype=jnp.float32, row_tile=row_tile)
    return out[:n, :out_ch]           # kernel output is lane-dense [n_pad, round_up(out,128)]


# --------------------------------- host-side param prep ---------------------------------- #

def linear_init(key, fan_in, fan_out):
    """PyTorch nn.Linear-style uniform init; weight stored pre-transposed [in, out]."""
    k1, k2 = jax.random.split(key)
    bound = 1.0 / (fan_in ** 0.5)
    w = jax.random.uniform(k1, (fan_in, fan_out), jnp.float32, -bound, bound)
    b = jax.random.uniform(k2, (1, fan_out), jnp.float32, -bound, bound)
    return w, b


def init_params(key, in_channels, hidden_channels, out_channels, num_layers=2, hops=2):
    """Logical (unpadded, per-hop) parameters matching the PyTorch module."""
    keys = iter(jax.random.split(key, 64))
    convs = [[linear_init(next(keys), in_channels, hidden_channels) for _ in range(hops + 1)]]
    for _ in range(num_layers - 2):
        convs.append([linear_init(next(keys), hidden_channels * (hops + 1), hidden_channels)
                      for _ in range(hops + 1)])
    convs.append([linear_init(next(keys), hidden_channels * (hops + 1), out_channels)
                  for _ in range(hops + 1)])
    bns = []
    for _ in range(num_layers - 1):
        c = hidden_channels * (hops + 1)
        bns.append((jnp.ones((c,), jnp.float32), jnp.zeros((c,), jnp.float32),
                    jnp.zeros((c,), jnp.float32), jnp.ones((c,), jnp.float32)))
    final = linear_init(next(keys), out_channels * (hops + 1), out_channels)
    return {"convs": convs, "bns": bns, "final": final}


def fold_and_pack_params(params, hops, eps=1e-5):
    """Fold eval-mode BatchNorm into scale/shift and pack per-hop weights into contiguous
    (hops packed back-to-back, NOT 128 per hop) lane-padded slabs; pad rows/cols are zero."""
    h1 = hops + 1
    convs, bns = params["convs"], params["bns"]
    wf, bf = params["final"]

    packed_convs = []
    for lins in convs:
        in_dim, out_w = lins[0][0].shape
        rows_pad = _round_up(in_dim, LANE)
        cols_pad = _round_up(h1 * out_w, LANE)
        w_cat = jnp.zeros((rows_pad, cols_pad), jnp.float32)
        b_cat = jnp.zeros((1, cols_pad), jnp.float32)
        for j, (w, b) in enumerate(lins):
            w_cat = w_cat.at[:in_dim, j * out_w:(j + 1) * out_w].set(w)
            b_cat = b_cat.at[:, j * out_w:(j + 1) * out_w].set(b.reshape(1, out_w))
        packed_convs.append((w_cat.astype(jnp.bfloat16), b_cat, out_w))

    packed_bns = []
    for li, (gamma, beta, mean, var) in enumerate(bns):
        out_w = packed_convs[li][2]
        c = h1 * out_w
        c_pad = _round_up(c, LANE)
        s = gamma / jnp.sqrt(var + eps)
        t = beta - mean * s
        s_pad = jnp.zeros((1, c_pad), jnp.float32).at[:, :c].set(s.reshape(1, c))
        t_pad = jnp.zeros((1, c_pad), jnp.float32).at[:, :c].set(t.reshape(1, c))
        packed_bns.append((s_pad, t_pad))

    last_out_w = packed_convs[-1][2]
    cat_w = h1 * last_out_w
    rows_pad = _round_up(cat_w, LANE)
    out_ch = wf.shape[1]
    out_pad = _round_up(out_ch, LANE)
    wf_pad = jnp.zeros((rows_pad, out_pad), jnp.float32).at[:cat_w, :out_ch].set(wf)
    bf_pad = jnp.zeros((1, out_pad), jnp.float32).at[:, :out_ch].set(bf.reshape(1, out_ch))
    return {"convs": packed_convs, "bns": packed_bns,
            "final": (wf_pad.astype(jnp.bfloat16), bf_pad), "out_channels": out_ch}


def build_gcn_adj_t(edge_index, n, dtype=jnp.float32):
    """gcn_norm(edge_index, None, n, improved=False, add_self_loops=True) followed by
    adj_t = SparseTensor(row=col, col=row, value=norm), densified."""
    row, col = edge_index
    loop = jnp.arange(n, dtype=row.dtype)
    row = jnp.concatenate([row, loop])
    col = jnp.concatenate([col, loop])
    ew = jnp.ones(row.shape[0], dtype)
    deg = jnp.zeros((n,), dtype).at[col].add(ew)
    dis = jnp.where(deg > 0, 1.0 / jnp.sqrt(deg), 0.0)
    norm = dis[row] * ew * dis[col]
    adj_t = jnp.zeros((n, n), dtype).at[col, row].add(norm)   # transposed, densified
    return adj_t


# ----------------------------------- pure-JAX reference ---------------------------------- #

def mixhop_reference(x, adj_t, params, hops=2, eps=1e-5):
    """Eval-mode reference mirroring the kernel's bf16 cast points exactly."""
    adj = adj_t.astype(jnp.bfloat16)
    act = x.astype(jnp.bfloat16)
    convs, bns = params["convs"], params["bns"]
    pending_bn = None
    for li, lins in enumerate(convs):
        if pending_bn is not None:
            gamma, beta, mean, var = pending_bn
            s = gamma / jnp.sqrt(var + eps)
            t = beta - mean * s
            act = jnp.maximum(act.astype(jnp.float32) * s + t, 0.0).astype(jnp.bfloat16)
        parts = []
        for j, (w, b) in enumerate(lins):
            hj = (jnp.dot(act, w.astype(jnp.bfloat16),
                          preferred_element_type=jnp.float32) + b).astype(jnp.bfloat16)
            for _ in range(j):
                hj = jnp.dot(adj, hj, preferred_element_type=jnp.float32).astype(jnp.bfloat16)
            parts.append(hj)
        act = jnp.concatenate(parts, axis=1)
        pending_bn = bns[li] if li < len(convs) - 1 else None
    wf, bf = params["final"]
    return jnp.dot(act, wf.astype(jnp.bfloat16), preferred_element_type=jnp.float32) + bf


# ---------------------------------------- main ------------------------------------------- #

if __name__ == "__main__":
    N_NODES = 64
    IN_CH = 16
    HIDDEN = 32
    OUT_CH = 8
    HOPS = 2
    NUM_LAYERS = 2
    N_EDGES = 256

    key = jax.random.PRNGKey(0)
    k_feat, k_edge, k_params = jax.random.split(key, 3)

    x = jax.random.normal(k_feat, (N_NODES, IN_CH), jnp.float32)
    edge_index = jax.random.randint(k_edge, (2, N_EDGES), 0, N_NODES, dtype=jnp.int32)

    adj_t = build_gcn_adj_t(edge_index, N_NODES, dtype=jnp.float32)
    params = init_params(k_params, IN_CH, HIDDEN, OUT_CH,
                         num_layers=NUM_LAYERS, hops=HOPS)
    packed = fold_and_pack_params(params, hops=HOPS)

    out = mixhop_forward(x, adj_t, packed, hops=HOPS)
    out = jax.block_until_ready(out)
    assert out.shape == (N_NODES, OUT_CH), out.shape
    assert bool(jnp.all(jnp.isfinite(out)))

    ref = mixhop_reference(x, adj_t, params, hops=HOPS)
    assert bool(jnp.allclose(out, ref, rtol=1e-2, atol=1e-2)), \
        float(jnp.max(jnp.abs(out - ref)))

    print("KERNEL_OK")
</pallas_src>

<mosaic_0001>
module attributes {stable_mosaic.version = 11 : i64} {
  func.func @kernel(%arg0: i32, %arg1: i32, %arg2: memref<512x128xbf16, #tpu.memory_space<vmem>>, %arg3: memref<128x128xbf16, #tpu.memory_space<vmem>>, %arg4: memref<1x128xf32, #tpu.memory_space<vmem>>, %arg5: memref<512x128xbf16, #tpu.memory_space<vmem>>, %arg6: memref<512x128xf32, #tpu.memory_space<vmem>>) attributes {dimension_semantics = [#tpu.dimension_semantics<parallel>, #tpu.dimension_semantics<arbitrary>], iteration_bounds = array<i64: 1, 1>, scalar_prefetch = 0 : i64, scratch_operands = 1 : i64, tpu.core_type = #tpu.core_type<tc>, window_params = [{transform_indices = @transform_0, window_bounds = array<i64: 512, 128>}, {transform_indices = @transform_1, window_bounds = array<i64: 128, 128>}, {pipeline_mode = #tpu.pipeline_mode<synchronous>, transform_indices = @transform_2, window_bounds = array<i64: 1, 128>}, {transform_indices = @transform_3, window_bounds = array<i64: 512, 128>}]} {
    %c0_i32 = arith.constant 0 : i32
    %0 = arith.cmpi eq, %arg1, %c0_i32 : i32
    %1 = arith.extui %0 : i1 to i32
    %c0_i32_0 = arith.constant 0 : i32
    %2 = arith.cmpi ne, %1, %c0_i32_0 : i32
    scf.if %2 {
      %cst_10 = arith.constant 0.000000e+00 : f32
      %12 = vector.broadcast %cst_10 : f32 to vector<512x128xf32>
      %c0_11 = arith.constant 0 : index
      %c0_12 = arith.constant 0 : index
      %13 = vector.load %arg6[%c0_11, %c0_12] : memref<512x128xf32, #tpu.memory_space<vmem>>, vector<512x128xf32>
      tpu.vector_store %arg6[%c0_11, %c0_12], %12 {strides = array<i32>} : memref<512x128xf32, #tpu.memory_space<vmem>>, vector<512x128xf32>,
    } else {
    }
    %c0 = arith.constant 0 : index
    %c0_1 = arith.constant 0 : index
    %3 = vector.load %arg2[%c0, %c0_1] : memref<512x128xbf16, #tpu.memory_space<vmem>>, vector<512x128xbf16>
    %c0_2 = arith.constant 0 : index
    %c0_3 = arith.constant 0 : index
    %4 = vector.load %arg6[%c0_2, %c0_3] : memref<512x128xf32, #tpu.memory_space<vmem>>, vector<512x128xf32>
    %c0_4 = arith.constant 0 : index
    %c0_5 = arith.constant 0 : index
    %5 = vector.load %arg3[%c0_4, %c0_5] : memref<128x128xbf16, #tpu.memory_space<vmem>>, vector<128x128xbf16>
    %cst = arith.constant dense<0.000000e+00> : vector<512x128xf32>
    %6 = tpu.matmul %3, %5, %cst {dimension_numbers = #tpu.dot_dimension_numbers<[1], [0], [0], [1], [0, 0, 1, 1], [], []>} : vector<512x128xbf16>, vector<128x128xbf16>, vector<512x128xf32> -> vector<512x128xf32>
    %7 = arith.addf %4, %6 : vector<512x128xf32>
    %c0_6 = arith.constant 0 : index
    %c0_7 = arith.constant 0 : index
    %8 = vector.load %arg6[%c0_6, %c0_7] : memref<512x128xf32, #tpu.memory_space<vmem>>, vector<512x128xf32>
    tpu.vector_store %arg6[%c0_6, %c0_7], %7 {strides = array<i32>} : memref<512x128xf32, #tpu.memory_space<vmem>>, vector<512x128xf32>,
    %c0_i32_8 = arith.constant 0 : i32
    %9 = arith.cmpi eq, %arg1, %c0_i32_8 : i32
    %10 = arith.extui %9 : i1 to i32
    %c0_i32_9 = arith.constant 0 : i32
    %11 = arith.cmpi ne, %10, %c0_i32_9 : i32
    scf.if %11 {
      %c0_10 = arith.constant 0 : index
      %c0_11 = arith.constant 0 : index
      %12 = vector.load %arg6[%c0_10, %c0_11] : memref<512x128xf32, #tpu.memory_space<vmem>>, vector<512x128xf32>
      %c0_12 = arith.constant 0 : index
      %c0_13 = arith.constant 0 : index
      %13 = vector.load %arg4[%c0_12, %c0_13] : memref<1x128xf32, #tpu.memory_space<vmem>>, vector<1x128xf32>
      %14 = vector.broadcast %13 : vector<1x128xf32> to vector<512x128xf32>
      %15 = arith.addf %12, %14 : vector<512x128xf32>
      %16 = arith.truncf %15 : vector<512x128xf32> to vector<512x128xbf16>
      %c0_14 = arith.constant 0 : index
      %c0_15 = arith.constant 0 : index
      %17 = vector.load %arg5[%c0_14, %c0_15] : memref<512x128xbf16, #tpu.memory_space<vmem>>, vector<512x128xbf16>
      tpu.vector_store %arg5[%c0_14, %c0_15], %16 {strides = array<i32>} : memref<512x128xbf16, #tpu.memory_space<vmem>>, vector<512x128xbf16>,
    } else {
    }
    return
  }
  func.func @transform_0(%arg0: i32, %arg1: i32) -> (i32, i32) {
    %c0_i32 = arith.constant 0 : i32
    return %arg0, %arg1 : i32, i32
  }
  func.func @transform_1(%arg0: i32, %arg1: i32) -> (i32, i32) {
    %c0_i32 = arith.constant 0 : i32
    %c0_i32_0 = arith.constant 0 : i32
    return %arg1, %c0_i32 : i32, i32
  }
  func.func @transform_2(%arg0: i32, %arg1: i32) -> (i32, i32) {
    %c0_i32 = arith.constant 0 : i32
    %c0_i32_0 = arith.constant 0 : i32
    %c0_i32_1 = arith.constant 0 : i32
    return %c0_i32, %c0_i32_0 : i32, i32
  }
  func.func @transform_3(%arg0: i32, %arg1: i32) -> (i32, i32) {
    %c0_i32 = arith.constant 0 : i32
    %c0_i32_0 = arith.constant 0 : i32
    return %arg0, %c0_i32 : i32, i32
  }
}

</mosaic_0001>

<llo_original>
// kernel: tpu_custom_call.1
$region0: #{tpu_custom_call.1}
  #allocation0 [shape = 'u32[]', space=smem, size = 0x4, offset = 0x4, fixed_abs, tag = 'smem constant byte address 0x4 - core index']
  #allocation1 [shape = 'u32[144,128]{1,0:T(1,128)}', space=vmem, size = 0x12000, scoped, tag = 'internal scratch']
  #allocation2 [shape = 'f32[512,128]{1,0:T(8,128)}', space=vmem, size = 0x40000, scoped, tag = 'scratch operand']
  %s0 = inlined_call_operand.hbm [shape: bf16[512,128], index: 0, kind: input, shape index: {}]
  %s1 = inlined_call_operand.hbm [shape: bf16[128,128], index: 1, kind: input, shape index: {}]
  %s2 = inlined_call_operand.vmem [shape: f32[1,128], index: 2, kind: input, shape index: {}]
  %s3 = inlined_call_operand.hbm [shape: bf16[512,128], index: 3, kind: output, shape index: {}]
  %s4 = sld [smem:[#allocation0]]
  $region38: #{tpu_custom_call.1} parent=0
    _
  %s6 = ssub.s32 1, %s4
  %s7 = scalar_select 0, %s6, %s4
  $region1: #{tpu_custom_call.1} parent=0
    #allocation3 [shape = 'u8[131072]{0}', space=vmem, size = 0x20000, scoped, tag = 'input window, operand 0, single buffered']
    #allocation4 [shape = 's32[1]{0}', space=sflag, size = 0x4, scoped, tag = 'scoped memory for tpu_custom_call.1']
    #allocation5 [shape = 's32[1]{0}', space=sflag, size = 0x4, scoped, tag = 'scoped memory for tpu_custom_call.1']
    #allocation6 [shape = 'u8[32768]{0}', space=vmem, size = 0x8000, scoped, tag = 'input window, operand 1, single buffered']
    #allocation7 [shape = 's32[1]{0}', space=sflag, size = 0x4, scoped, tag = 'scoped memory for tpu_custom_call.1']
    #allocation8 [shape = 'u8[131072]{0}', space=vmem, size = 0x20000, scoped, tag = 'output window, operand 0, single buffered']
    %8 = vsyncpa [#allocation4], 0
    %9 = vsyncpa [#allocation7], 0
    %10 = vsyncpa [#allocation5], 0
    // Predicated region
    $region2: #{tpu_custom_call.1} parent=1 // pred_check
      _
    $region3: #{tpu_custom_call.1} parent=1 // pred_check_branch
      %12 = sbr.rel (0) target = $region5
    $region4: #{tpu_custom_call.1} parent=1 // pred_region
      %s14 = ssub.s32 4096, 4096
      %15 = vsyncadd [#allocation4], %s14
      %s16 = sshll.u32 [#allocation3], 4
      %s17 = int_to_ptr.vmem [resolvable:$true] %s16
      %22 = dma.hbm_to_vmem [thread:$0]  %s0, 4096, %s17, [#allocation4], 64, 64, 4
    $region5: #{tpu_custom_call.1} parent=1 // pred_fallthru
      _
    // Predicated region
    $region6: #{tpu_custom_call.1} parent=1 // pred_check
      _
    $region7: #{tpu_custom_call.1} parent=1 // pred_check_branch
      %24 = sbr.rel (0) target = $region9
    $region8: #{tpu_custom_call.1} parent=1 // pred_region
      %s26 = ssub.s32 1024, 1024
      %27 = vsyncadd [#allocation7], %s26
      %s28 = sshll.u32 [#allocation6], 4
      %s29 = int_to_ptr.vmem [resolvable:$true] %s28
      %34 = dma.hbm_to_vmem [thread:$0]  %s1, 1024, %s29, [#allocation7], 64, 64, 4
    $region9: #{tpu_custom_call.1} parent=1 // pred_fallthru
      _
    // Predicated region
    $region10: #{tpu_custom_call.1} parent=1 // pred_check
      _
    $region11: #{tpu_custom_call.1} parent=1 // pred_check_branch
      %36 = sbr.rel (0) target = $region13
    $region12: #{tpu_custom_call.1} parent=1 // pred_region
      _
    $region13: #{tpu_custom_call.1} parent=1 // pred_fallthru
      _
    // Predicated region
    $region14: #{tpu_custom_call.1} parent=1 // pred_check
      _
    $region15: #{tpu_custom_call.1} parent=1 // pred_check_branch
      %38 = sbr.rel (0) target = $region17
    $region16: #{tpu_custom_call.1} parent=1 // pred_region
      %39 = dma.done [#allocation4], 4096
    $region17: #{tpu_custom_call.1} parent=1 // pred_fallthru
      _
    // Predicated region
    $region18: #{tpu_custom_call.1} parent=1 // pred_check
      _
    $region19: #{tpu_custom_call.1} parent=1 // pred_check_branch
      %41 = sbr.rel (0) target = $region21
    $region20: #{tpu_custom_call.1} parent=1 // pred_region
      %42 = dma.done [#allocation7], 1024
    $region21: #{tpu_custom_call.1} parent=1 // pred_fallthru
      _
    %p44 = scmp.eq.s32.totalorder 0, 0
    // Predicated region
    $region22: #{tpu_custom_call.1} parent=1 // pred_check
      %p45 = pneg %p44
    $region23: #{tpu_custom_call.1} parent=1 // pred_check_branch
      %47 = sbr.rel (%p45) target = $region25
    $region24: #{tpu_custom_call.1} parent=1 // pred_region
      %48 = vst [vmem:[#allocation2] sm:$0xff] 0.0
      %49 = vst [vmem:[#allocation2 + $0x8] sm:$0xff] 0.0
      %50 = vst [vmem:[#allocation2 + $0x10] sm:$0xff] 0.0
      %51 = vst [vmem:[#allocation2 + $0x18] sm:$0xff] 0.0
      %52 = vst [vmem:[#allocation2 + $0x20] sm:$0xff] 0.0
      %53 = vst [vmem:[#allocation2 + $0x28] sm:$0xff] 0.0
      %54 = vst [vmem:[#allocation2 + $0x30] sm:$0xff] 0.0
      %55 = vst [vmem:[#allocation2 + $0x38] sm:$0xff] 0.0
      %56 = vst [vmem:[#allocation2 + $0x40] sm:$0xff] 0.0
      %57 = vst [vmem:[#allocation2 + $0x48] sm:$0xff] 0.0
      %58 = vst [vmem:[#allocation2 + $0x50] sm:$0xff] 0.0
      %59 = vst [vmem:[#allocation2 + $0x58] sm:$0xff] 0.0
      %60 = vst [vmem:[#allocation2 + $0x60] sm:$0xff] 0.0
      %61 = vst [vmem:[#allocation2 + $0x68] sm:$0xff] 0.0
      %62 = vst [vmem:[#allocation2 + $0x70] sm:$0xff] 0.0
      %63 = vst [vmem:[#allocation2 + $0x78] sm:$0xff] 0.0
      %64 = vst [vmem:[#allocation2 + $0x80] sm:$0xff] 0.0
      %65 = vst [vmem:[#allocation2 + $0x88] sm:$0xff] 0.0
      %66 = vst [vmem:[#allocation2 + $0x90] sm:$0xff] 0.0
      %67 = vst [vmem:[#allocation2 + $0x98] sm:$0xff] 0.0
      %68 = vst [vmem:[#allocation2 + $0xa0] sm:$0xff] 0.0
      %69 = vst [vmem:[#allocation2 + $0xa8] sm:$0xff] 0.0
      %70 = vst [vmem:[#allocation2 + $0xb0] sm:$0xff] 0.0
      %71 = vst [vmem:[#allocation2 + $0xb8] sm:$0xff] 0.0
      %72 = vst [vmem:[#allocation2 + $0xc0] sm:$0xff] 0.0
      %73 = vst [vmem:[#allocation2 + $0xc8] sm:$0xff] 0.0
      %74 = vst [vmem:[#allocation2 + $0xd0] sm:$0xff] 0.0
      %75 = vst [vmem:[#allocation2 + $0xd8] sm:$0xff] 0.0
      %76 = vst [vmem:[#allocation2 + $0xe0] sm:$0xff] 0.0
      %77 = vst [vmem:[#allocation2 + $0xe8] sm:$0xff] 0.0
      %78 = vst [vmem:[#allocation2 + $0xf0] sm:$0xff] 0.0
      %79 = vst [vmem:[#allocation2 + $0xf8] sm:$0xff] 0.0
      %80 = vst [vmem:[#allocation2 + $0x100] sm:$0xff] 0.0
      %81 = vst [vmem:[#allocation2 + $0x108] sm:$0xff] 0.0
      %82 = vst [vmem:[#allocation2 + $0x110] sm:$0xff] 0.0
      %83 = vst [vmem:[#allocation2 + $0x118] sm:$0xff] 0.0
      %84 = vst [vmem:[#allocation2 + $0x120] sm:$0xff] 0.0
      %85 = vst [vmem:[#allocation2 + $0x128] sm:$0xff] 0.0
      %86 = vst [vmem:[#allocation2 + $0x130] sm:$0xff] 0.0
      %87 = vst [vmem:[#allocation2 + $0x138] sm:$0xff] 0.0
      %88 = vst [vmem:[#allocation2 + $0x140] sm:$0xff] 0.0
      %89 = vst [vmem:[#allocation2 + $0x148] sm:$0xff] 0.0
      %90 = vst [vmem:[#allocation2 + $0x150] sm:$0xff] 0.0
      %91 = vst [vmem:[#allocation2 + $0x158] sm:$0xff] 0.0
      %92 = vst [vmem:[#allocation2 + $0x160] sm:$0xff] 0.0
      %93 = vst [vmem:[#allocation2 + $0x168] sm:$0xff] 0.0
      %94 = vst [vmem:[#allocation2 + $0x170] sm:$0xff] 0.0
      %95 = vst [vmem:[#allocation2 + $0x178] sm:$0xff] 0.0
      %96 = vst [vmem:[#allocation2 + $0x180] sm:$0xff] 0.0
      %97 = vst [vmem:[#allocation2 + $0x188] sm:$0xff] 0.0
      %98 = vst [vmem:[#allocation2 + $0x190] sm:$0xff] 0.0
      %99 = vst [vmem:[#allocation2 + $0x198] sm:$0xff] 0.0
      %100 = vst [vmem:[#allocation2 + $0x1a0] sm:$0xff] 0.0
      %101 = vst [vmem:[#allocation2 + $0x1a8] sm:$0xff] 0.0
      %102 = vst [vmem:[#allocation2 + $0x1b0] sm:$0xff] 0.0
      %103 = vst [vmem:[#allocation2 + $0x1b8] sm:$0xff] 0.0
      %104 = vst [vmem:[#allocation2 + $0x1c0] sm:$0xff] 0.0
      %105 = vst [vmem:[#allocation2 + $0x1c8] sm:$0xff] 0.0
      %106 = vst [vmem:[#allocation2 + $0x1d0] sm:$0xff] 0.0
      %107 = vst [vmem:[#allocation2 + $0x1d8] sm:$0xff] 0.0
      %108 = vst [vmem:[#allocation2 + $0x1e0] sm:$0xff] 0.0
      %109 = vst [vmem:[#allocation2 + $0x1e8] sm:$0xff] 0.0
      %110 = vst [vmem:[#allocation2 + $0x1f0] sm:$0xff] 0.0
      %111 = vst [vmem:[#allocation2 + $0x1f8] sm:$0xff] 0.0
    $region25: #{tpu_custom_call.1} parent=1 // pred_fallthru
      _
    %v112 = vld [vmem:[#allocation3] sm:$0xf]
    %v113 = vld [vmem:[#allocation3 + $0x4] sm:$0xf]
    %v114 = vld [vmem:[#allocation3 + $0x8] sm:$0xf]
    %v115 = vld [vmem:[#allocation3 + $0xc] sm:$0xf]
    %v116 = vld [vmem:[#allocation3 + $0x10] sm:$0xf]
    %v117 = vld [vmem:[#allocation3 + $0x14] sm:$0xf]
    %v118 = vld [vmem:[#allocation3 + $0x18] sm:$0xf]
    %v119 = vld [vmem:[#allocation3 + $0x1c] sm:$0xf]
    %v120 = vld [vmem:[#allocation3 + $0x20] sm:$0xf]
    %v121 = vld [vmem:[#allocation3 + $0x24] sm:$0xf]
    %v122 = vld [vmem:[#allocation3 + $0x28] sm:$0xf]
    %v123 = vld [vmem:[#allocation3 + $0x2c] sm:$0xf]
    %v124 = vld [vmem:[#allocation3 + $0x30] sm:$0xf]
    %v125 = vld [vmem:[#allocation3 + $0x34] sm:$0xf]
    %v126 = vld [vmem:[#allocation3 + $0x38] sm:$0xf]
    %v127 = vld [vmem:[#allocation3 + $0x3c] sm:$0xf]
    %v128 = vld [vmem:[#allocation3 + $0x40] sm:$0xf]
    %v129 = vld [vmem:[#allocation3 + $0x44] sm:$0xf]
    %v130 = vld [vmem:[#allocation3 + $0x48] sm:$0xf]
    %v131 = vld [vmem:[#allocation3 + $0x4c] sm:$0xf]
    %v132 = vld [vmem:[#allocation3 + $0x50] sm:$0xf]
    %v133 = vld [vmem:[#allocation3 + $0x54] sm:$0xf]
    %v134 = vld [vmem:[#allocation3 + $0x58] sm:$0xf]
    %v135 = vld [vmem:[#allocation3 + $0x5c] sm:$0xf]
    %v136 = vld [vmem:[#allocation3 + $0x60] sm:$0xf]
    %v137 = vld [vmem:[#allocation3 + $0x64] sm:$0xf]
    %v138 = vld [vmem:[#allocation3 + $0x68] sm:$0xf]
    %v139 = vld [vmem:[#allocation3 + $0x6c] sm:$0xf]
    %v140 = vld [vmem:[#allocation3 + $0x70] sm:$0xf]
    %v141 = vld [vmem:[#allocation3 + $0x74] sm:$0xf]
    %v142 = vld [vmem:[#allocation3 + $0x78] sm:$0xf]
    %v143 = vld [vmem:[#allocation3 + $0x7c] sm:$0xf]
    %v144 = vld [vmem:[#allocation3 + $0x80] sm:$0xf]
    %v145 = vld [vmem:[#allocation3 + $0x84] sm:$0xf]
    %v146 = vld [vmem:[#allocation3 + $0x88] sm:$0xf]
    %v147 = vld [vmem:[#allocation3 + $0x8c] sm:$0xf]
    %v148 = vld [vmem:[#allocation3 + $0x90] sm:$0xf]
    %v149 = vld [vmem:[#allocation3 + $0x94] sm:$0xf]
    %v150 = vld [vmem:[#allocation3 + $0x98] sm:$0xf]
    %v151 = vld [vmem:[#allocation3 + $0x9c] sm:$0xf]
    %v152 = vld [vmem:[#allocation3 + $0xa0] sm:$0xf]
    %v153 = vld [vmem:[#allocation3 + $0xa4] sm:$0xf]
    %v154 = vld [vmem:[#allocation3 + $0xa8] sm:$0xf]
    %v155 = vld [vmem:[#allocation3 + $0xac] sm:$0xf]
    %v156 = vld [vmem:[#allocation3 + $0xb0] sm:$0xf]
    %v157 = vld [vmem:[#allocation3 + $0xb4] sm:$0xf]
    %v158 = vld [vmem:[#allocation3 + $0xb8] sm:$0xf]
    %v159 = vld [vmem:[#allocation3 + $0xbc] sm:$0xf]
    %v160 = vld [vmem:[#allocation3 + $0xc0] sm:$0xf]
    %v161 = vld [vmem:[#allocation3 + $0xc4] sm:$0xf]
    %v162 = vld [vmem:[#allocation3 + $0xc8] sm:$0xf]
    %v163 = vld [vmem:[#allocation3 + $0xcc] sm:$0xf]
    %v164 = vld [vmem:[#allocation3 + $0xd0] sm:$0xf]
    %v165 = vld [vmem:[#allocation3 + $0xd4] sm:$0xf]
    %v166 = vld [vmem:[#allocation3 + $0xd8] sm:$0xf]
    %v167 = vld [vmem:[#allocation3 + $0xdc] sm:$0xf]
    %v168 = vld [vmem:[#allocation3 + $0xe0] sm:$0xf]
    %v169 = vld [vmem:[#allocation3 + $0xe4] sm:$0xf]
    %v170 = vld [vmem:[#allocation3 + $0xe8] sm:$0xf]
    %v171 = vld [vmem:[#allocation3 + $0xec] sm:$0xf]
    %v172 = vld [vmem:[#allocation3 + $0xf0] sm:$0xf]
    %v173 = vld [vmem:[#allocation3 + $0xf4] sm:$0xf]
    %v174 = vld [vmem:[#allocation3 + $0xf8] sm:$0xf]
    %v175 = vld [vmem:[#allocation3 + $0xfc] sm:$0xf]
    %v176 = vld [vmem:[#allocation2] sm:$0xff]
    %v177 = vld [vmem:[#allocation2 + $0x8] sm:$0xff]
    %v178 = vld [vmem:[#allocation2 + $0x10] sm:$0xff]
    %v179 = vld [vmem:[#allocation2 + $0x18] sm:$0xff]
    %v180 = vld [vmem:[#allocation2 + $0x20] sm:$0xff]
    %v181 = vld [vmem:[#allocation2 + $0x28] sm:$0xff]
    %v182 = vld [vmem:[#allocation2 + $0x30] sm:$0xff]
    %v183 = vld [vmem:[#allocation2 + $0x38] sm:$0xff]
    %v184 = vld [vmem:[#allocation2 + $0x40] sm:$0xff]
    %v185 = vld [vmem:[#allocation2 + $0x48] sm:$0xff]
    %v186 = vld [vmem:[#allocation2 + $0x50] sm:$0xff]
    %v187 = vld [vmem:[#allocation2 + $0x58] sm:$0xff]
    %v188 = vld [vmem:[#allocation2 + $0x60] sm:$0xff]
    %v189 = vld [vmem:[#allocation2 + $0x68] sm:$0xff]
    %v190 = vld [vmem:[#allocation2 + $0x70] sm:$0xff]
    %v191 = vld [vmem:[#allocation2 + $0x78] sm:$0xff]
    %v192 = vld [vmem:[#allocation2 + $0x80] sm:$0xff]
    %v193 = vld [vmem:[#allocation2 + $0x88] sm:$0xff]
    %v194 = vld [vmem:[#allocation2 + $0x90] sm:$0xff]
    %v195 = vld [vmem:[#allocation2 + $0x98] sm:$0xff]
    %v196 = vld [vmem:[#allocation2 + $0xa0] sm:$0xff]
    %v197 = vld [vmem:[#allocation2 + $0xa8] sm:$0xff]
    %v198 = vld [vmem:[#allocation2 + $0xb0] sm:$0xff]
    %v199 = vld [vmem:[#allocation2 + $0xb8] sm:$0xff]
    %v200 = vld [vmem:[#allocation2 + $0xc0] sm:$0xff]
    %v201 = vld [vmem:[#allocation2 + $0xc8] sm:$0xff]
    %v202 = vld [vmem:[#allocation2 + $0xd0] sm:$0xff]
    %v203 = vld [vmem:[#allocation2 + $0xd8] sm:$0xff]
    %v204 = vld [vmem:[#allocation2 + $0xe0] sm:$0xff]
    %v205 = vld [vmem:[#allocation2 + $0xe8] sm:$0xff]
    %v206 = vld [vmem:[#allocation2 + $0xf0] sm:$0xff]
    %v207 = vld [vmem:[#allocation2 + $0xf8] sm:$0xff]
    %v208 = vld [vmem:[#allocation2 + $0x100] sm:$0xff]
    %v209 = vld [vmem:[#allocation2 + $0x108] sm:$0xff]
    %v210 = vld [vmem:[#allocation2 + $0x110] sm:$0xff]
    %v211 = vld [vmem:[#allocation2 + $0x118] sm:$0xff]
    %v212 = vld [vmem:[#allocation2 + $0x120] sm:$0xff]
    %v213 = vld [vmem:[#allocation2 + $0x128] sm:$0xff]
    %v214 = vld [vmem:[#allocation2 + $0x130] sm:$0xff]
    %v215 = vld [vmem:[#allocation2 + $0x138] sm:$0xff]
    %v216 = vld [vmem:[#allocation2 + $0x140] sm:$0xff]
    %v217 = vld [vmem:[#allocation2 + $0x148] sm:$0xff]
    %v218 = vld [vmem:[#allocation2 + $0x150] sm:$0xff]
    %v219 = vld [vmem:[#allocation2 + $0x158] sm:$0xff]
    %v220 = vld [vmem:[#allocation2 + $0x160] sm:$0xff]
    %v221 = vld [vmem:[#allocation2 + $0x168] sm:$0xff]
    %v222 = vld [vmem:[#allocation2 + $0x170] sm:$0xff]
    %v223 = vld [vmem:[#allocation2 + $0x178] sm:$0xff]
    %v224 = vld [vmem:[#allocation2 + $0x180] sm:$0xff]
    %v225 = vld [vmem:[#allocation2 + $0x188] sm:$0xff]
    %v226 = vld [vmem:[#allocation2 + $0x190] sm:$0xff]
    %v227 = vld [vmem:[#allocation2 + $0x198] sm:$0xff]
    %v228 = vld [vmem:[#allocation2 + $0x1a0] sm:$0xff]
    %v229 = vld [vmem:[#allocation2 + $0x1a8] sm:$0xff]
    %v230 = vld [vmem:[#allocation2 + $0x1b0] sm:$0xff]
    %v231 = vld [vmem:[#allocation2 + $0x1b8] sm:$0xff]
    %v232 = vld [vmem:[#allocation2 + $0x1c0] sm:$0xff]
    %v233 = vld [vmem:[#allocation2 + $0x1c8] sm:$0xff]
    %v234 = vld [vmem:[#allocation2 + $0x1d0] sm:$0xff]
    %v235 = vld [vmem:[#allocation2 + $0x1d8] sm:$0xff]
    %v236 = vld [vmem:[#allocation2 + $0x1e0] sm:$0xff]
    %v237 = vld [vmem:[#allocation2 + $0x1e8] sm:$0xff]
    %v238 = vld [vmem:[#allocation2 + $0x1f0] sm:$0xff]
    %v239 = vld [vmem:[#allocation2 + $0x1f8] sm:$0xff]
    %v240 = vld [vmem:[#allocation6] sm:$0xf]
    %v241 = vld [vmem:[#allocation6 + $0x4] sm:$0xf]
    %v242 = vld [vmem:[#allocation6 + $0x8] sm:$0xf]
    %v243 = vld [vmem:[#allocation6 + $0xc] sm:$0xf]
    %v244 = vld [vmem:[#allocation6 + $0x10] sm:$0xf]
    %v245 = vld [vmem:[#allocation6 + $0x14] sm:$0xf]
    %v246 = vld [vmem:[#allocation6 + $0x18] sm:$0xf]
    %v247 = vld [vmem:[#allocation6 + $0x1c] sm:$0xf]
    %v248 = vld [vmem:[#allocation6 + $0x20] sm:$0xf]
    %v249 = vld [vmem:[#allocation6 + $0x24] sm:$0xf]
    %v250 = vld [vmem:[#allocation6 + $0x28] sm:$0xf]
    %v251 = vld [vmem:[#allocation6 + $0x2c] sm:$0xf]
    %v252 = vld [vmem:[#allocation6 + $0x30] sm:$0xf]
    %v253 = vld [vmem:[#allocation6 + $0x34] sm:$0xf]
    %v254 = vld [vmem:[#allocation6 + $0x38] sm:$0xf]
    %v255 = vld [vmem:[#allocation6 + $0x3c] sm:$0xf]
    %v320 = vunpack.c.l.b16 %v112
    %v321 = vunpack.c.l.b16 %v113
    %v322 = vunpack.c.l.b16 %v114
    %v323 = vunpack.c.l.b16 %v115
    %v324 = vunpack.c.l.b16 %v116
    %v325 = vunpack.c.l.b16 %v117
    %v326 = vunpack.c.l.b16 %v118
    %v327 = vunpack.c.l.b16 %v119
    %v328 = vunpack.c.l.b16 %v120
    %v329 = vunpack.c.l.b16 %v121
    %v330 = vunpack.c.l.b16 %v122
    %v331 = vunpack.c.l.b16 %v123
    %v332 = vunpack.c.l.b16 %v124
    %v333 = vunpack.c.l.b16 %v125
    %v334 = vunpack.c.l.b16 %v126
    %v335 = vunpack.c.l.b16 %v127
    %v336 = vunpack.c.l.b16 %v128
    %v337 = vunpack.c.l.b16 %v129
    %v338 = vunpack.c.l.b16 %v130
    %v339 = vunpack.c.l.b16 %v131
    %v340 = vunpack.c.l.b16 %v132
    %v341 = vunpack.c.l.b16 %v133
    %v342 = vunpack.c.l.b16 %v134
    %v343 = vunpack.c.l.b16 %v135
    %v344 = vunpack.c.l.b16 %v136
    %v345 = vunpack.c.l.b16 %v137
    %v346 = vunpack.c.l.b16 %v138
    %v347 = vunpack.c.l.b16 %v139
    %v348 = vunpack.c.l.b16 %v140
    %v349 = vunpack.c.l.b16 %v141
    %v350 = vunpack.c.l.b16 %v142
    %v351 = vunpack.c.l.b16 %v143
    %v352 = vunpack.c.l.b16 %v144
    %v353 = vunpack.c.l.b16 %v145
    %v354 = vunpack.c.l.b16 %v146
    %v355 = vunpack.c.l.b16 %v147
    %v356 = vunpack.c.l.b16 %v148
    %v357 = vunpack.c.l.b16 %v149
    %v358 = vunpack.c.l.b16 %v150
    %v359 = vunpack.c.l.b16 %v151
    %v360 = vunpack.c.l.b16 %v152
    %v361 = vunpack.c.l.b16 %v153
    %v362 = vunpack.c.l.b16 %v154
    %v363 = vunpack.c.l.b16 %v155
    %v364 = vunpack.c.l.b16 %v156
    %v365 = vunpack.c.l.b16 %v157
    %v366 = vunpack.c.l.b16 %v158
    %v367 = vunpack.c.l.b16 %v159
    %v368 = vunpack.c.l.b16 %v160
    %v369 = vunpack.c.l.b16 %v161
    %v370 = vunpack.c.l.b16 %v162
    %v371 = vunpack.c.l.b16 %v163
    %v372 = vunpack.c.l.b16 %v164
    %v373 = vunpack.c.l.b16 %v165
    %v374 = vunpack.c.l.b16 %v166
    %v375 = vunpack.c.l.b16 %v167
    %v376 = vunpack.c.l.b16 %v168
    %v377 = vunpack.c.l.b16 %v169
    %v378 = vunpack.c.l.b16 %v170
    %v379 = vunpack.c.l.b16 %v171
    %v380 = vunpack.c.l.b16 %v172
    %v381 = vunpack.c.l.b16 %v173
    %v382 = vunpack.c.l.b16 %v174
    %v383 = vunpack.c.l.b16 %v175
    %v384 = vpack.c.b16 %v321, %v320
    %v385 = vpack.c.b16 %v323, %v322
    %v386 = vpack.c.b16 %v325, %v324
    %v387 = vpack.c.b16 %v327, %v326
    %v388 = vpack.c.b16 %v329, %v328
    %v389 = vpack.c.b16 %v331, %v330
    %v390 = vpack.c.b16 %v333, %v332
    %v391 = vpack.c.b16 %v335, %v334
    %v392 = vpack.c.b16 %v337, %v336
    %v393 = vpack.c.b16 %v339, %v338
    %v394 = vpack.c.b16 %v341, %v340
    %v395 = vpack.c.b16 %v343, %v342
    %v396 = vpack.c.b16 %v345, %v344
    %v397 = vpack.c.b16 %v347, %v346
    %v398 = vpack.c.b16 %v349, %v348
    %v399 = vpack.c.b16 %v351, %v350
    %v400 = vpack.c.b16 %v353, %v352
    %v401 = vpack.c.b16 %v355, %v354
    %v402 = vpack.c.b16 %v357, %v356
    %v403 = vpack.c.b16 %v359, %v358
    %v404 = vpack.c.b16 %v361, %v360
    %v405 = vpack.c.b16 %v363, %v362
    %v406 = vpack.c.b16 %v365, %v364
    %v407 = vpack.c.b16 %v367, %v366
    %v408 = vpack.c.b16 %v369, %v368
    %v409 = vpack.c.b16 %v371, %v370
    %v410 = vpack.c.b16 %v373, %v372
    %v411 = vpack.c.b16 %v375, %v374
    %v412 = vpack.c.b16 %v377, %v376
    %v413 = vpack.c.b16 %v379, %v378
    %v414 = vpack.c.b16 %v381, %v380
    %v415 = vpack.c.b16 %v383, %v382
    %v464 = vunpack.c.l.b16 %v240
    %v465 = vunpack.c.l.b16 %v241
    %v466 = vunpack.c.l.b16 %v242
    %v467 = vunpack.c.l.b16 %v243
    %v468 = vunpack.c.l.b16 %v244
    %v469 = vunpack.c.l.b16 %v245
    %v470 = vunpack.c.l.b16 %v246
    %v471 = vunpack.c.l.b16 %v247
    %v472 = vunpack.c.l.b16 %v248
    %v473 = vunpack.c.l.b16 %v249
    %v474 = vunpack.c.l.b16 %v250
    %v475 = vunpack.c.l.b16 %v251
    %v476 = vunpack.c.l.b16 %v252
    %v477 = vunpack.c.l.b16 %v253
    %v478 = vunpack.c.l.b16 %v254
    %v479 = vunpack.c.l.b16 %v255
    %v480 = vpack.c.b16 %v465, %v464
    %v481 = vpack.c.b16 %v467, %v466
    %v482 = vpack.c.b16 %v469, %v468
    %v483 = vpack.c.b16 %v471, %v470
    %v484 = vpack.c.b16 %v473, %v472
    %v485 = vpack.c.b16 %v475, %v474
    %v486 = vpack.c.b16 %v477, %v476
    %v487 = vpack.c.b16 %v479, %v478
    %496 = vmatprep.subr.bf16.mxu0 0
    %497 = vmatpush1.bf16.msra.mxu0 %v480
    %498 = vmatprep.subr.bf16.mxu0 0
    %499 = vmatpush1.bf16.msra.mxu0 %v481
    %500 = vmatprep.subr.bf16.mxu0 0
    %501 = vmatpush1.bf16.msra.mxu0 %v482
    %502 = vmatprep.subr.bf16.mxu0 0
    %503 = vmatpush1.bf16.msra.mxu0 %v483
    %504 = vmatprep.subr.bf16.mxu0 0
    %505 = vmatpush1.bf16.msra.mxu0 %v484
    %506 = vmatprep.subr.bf16.mxu0 0
    %507 = vmatpush1.bf16.msra.mxu0 %v485
    %508 = vmatprep.subr.bf16.mxu0 0
    %509 = vmatpush1.bf16.msra.mxu0 %v486
    %510 = vmatprep.subr.bf16.mxu0 0
    %511 = vmatpush1.bf16.msra.mxu0 %v487
    %512 = vmatprep.subr.bf16.mxu0 0
    %513 = vmatpush1.bf16.msra.mxu0 0
    %514 = vmatprep.subr.bf16.mxu0 0
    %515 = vmatpush1.bf16.msra.mxu0 0
    %516 = vmatprep.subr.bf16.mxu0 0
    %517 = vmatpush1.bf16.msra.mxu0 0
    %518 = vmatprep.subr.bf16.mxu0 0
    %519 = vmatpush1.bf16.msra.mxu0 0
    %520 = vmatprep.subr.bf16.mxu0 0
    %521 = vmatpush1.bf16.msra.mxu0 0
    %522 = vmatprep.subr.bf16.mxu0 0
    %523 = vmatpush1.bf16.msra.mxu0 0
    %524 = vmatprep.subr.bf16.mxu0 0
    %525 = vmatpush1.bf16.msra.mxu0 0
    %526 = vmatprep.subr.bf16.mxu0 0
    %527 = vmatpush1.bf16.msra.mxu0 0
    %528 = vmatprep.mubr.bf16.mxu0 0
    %529 = vmatmul.mubr.bf16.gmra.mrb[0].mxu0 %v384
    %v530 = vpop.f32.mrb[0].mxu0
    %v531 = vadd.f32 0.0, %v530
    %v532 = vpop.f32.mrb[0].mxu0
    %v533 = vpop.f32.mrb[0].mxu0
    %v534 = vadd.f32 0.0, %v533
    %v535 = vpop.f32.mrb[0].mxu0
    %536 = vmatprep.mubr.bf16.mxu0 0
    %537 = vmatmul.mubr.bf16.gmra.mrb[0].mxu0 %v385
    %v538 = vpop.f32.mrb[0].mxu0
    %v539 = vadd.f32 0.0, %v538
    %v540 = vpop.f32.mrb[0].mxu0
    %v541 = vpop.f32.mrb[0].mxu0
    %v542 = vadd.f32 0.0, %v541
    %v543 = vpop.f32.mrb[0].mxu0
    %544 = vmatprep.mubr.bf16.mxu0 0
    %545 = vmatmul.mubr.bf16.gmra.mrb[0].mxu0 %v386
    %v546 = vpop.f32.mrb[0].mxu0
    %v547 = vadd.f32 0.0, %v546
    %v548 = vpop.f32.mrb[0].mxu0
    %v549 = vpop.f32.mrb[0].mxu0
    %v550 = vadd.f32 0.0, %v549
    %v551 = vpop.f32.mrb[0].mxu0
    %552 = vmatprep.mubr.bf16.mxu0 0
    %553 = vmatmul.mubr.bf16.gmra.mrb[0].mxu0 %v387
    %v554 = vpop.f32.mrb[0].mxu0
    %v555 = vadd.f32 0.0, %v554
    %v556 = vpop.f32.mrb[0].mxu0
    %v557 = vpop.f32.mrb[0].mxu0
    %v558 = vadd.f32 0.0, %v557
    %v559 = vpop.f32.mrb[0].mxu0
    %560 = vmatprep.mubr.bf16.mxu0 0
    %561 = vmatmul.mubr.bf16.gmra.mrb[0].mxu0 %v388
    %v562 = vpop.f32.mrb[0].mxu0
    %v563 = vadd.f32 0.0, %v562
    %v564 = vpop.f32.mrb[0].mxu0
    %v565 = vpop.f32.mrb[0].mxu0
    %v566 = vadd.f32 0.0, %v565
    %v567 = vpop.f32.mrb[0].mxu0
    %568 = vmatprep.mubr.bf16.mxu0 0
    %569 = vmatmul.mubr.bf16.gmra.mrb[0].mxu0 %v389
    %v570 = vpop.f32.mrb[0].mxu0
    %v571 = vadd.f32 0.0, %v570
    %v572 = vpop.f32.mrb[0].mxu0
    %v573 = vpop.f32.mrb[0].mxu0
    %v574 = vadd.f32 0.0, %v573
    %v575 = vpop.f32.mrb[0].mxu0
    %576 = vmatprep.mubr.bf16.mxu0 0
    %577 = vmatmul.mubr.bf16.gmra.mrb[0].mxu0 %v390
    %v578 = vpop.f32.mrb[0].mxu0
    %v579 = vadd.f32 0.0, %v578
    %v580 = vpop.f32.mrb[0].mxu0
    %v581 = vpop.f32.mrb[0].mxu0
    %v582 = vadd.f32 0.0, %v581
    %v583 = vpop.f32.mrb[0].mxu0
    %584 = vmatprep.mubr.bf16.mxu0 0
    %585 = vmatmul.mubr.bf16.gmra.mrb[0].mxu0 %v391
    %v586 = vpop.f32.mrb[0].mxu0
    %v587 = vadd.f32 0.0, %v586
    %v588 = vpop.f32.mrb[0].mxu0
    %v589 = vpop.f32.mrb[0].mxu0
    %v590 = vadd.f32 0.0, %v589
    %v591 = vpop.f32.mrb[0].mxu0
    %592 = vmatprep.mubr.bf16.mxu0 0
    %593 = vmatmul.mubr.bf16.gmra.mrb[0].mxu0 %v392
    %v594 = vpop.f32.mrb[0].mxu0
    %v595 = vadd.f32 0.0, %v594
    %v596 = vpop.f32.mrb[0].mxu0
    %v597 = vpop.f32.mrb[0].mxu0
    %v598 = vadd.f32 0.0, %v597
    %v599 = vpop.f32.mrb[0].mxu0
    %600 = vmatprep.mubr.bf16.mxu0 0
    %601 = vmatmul.mubr.bf16.gmra.mrb[0].mxu0 %v393
    %v602 = vpop.f32.mrb[0].mxu0
    %v603 = vadd.f32 0.0, %v602
    %v604 = vpop.f32.mrb[0].mxu0
    %v605 = vpop.f32.mrb[0].mxu0
    %v606 = vadd.f32 0.0, %v605
    %v607 = vpop.f32.mrb[0].mxu0
    %608 = vmatprep.mubr.bf16.mxu0 0
    %609 = vmatmul.mubr.bf16.gmra.mrb[0].mxu0 %v394
    %v610 = vpop.f32.mrb[0].mxu0
    %v611 = vadd.f32 0.0, %v610
    %v612 = vpop.f32.mrb[0].mxu0
    %v613 = vpop.f32.mrb[0].mxu0
    %v614 = vadd.f32 0.0, %v613
    %v615 = vpop.f32.mrb[0].mxu0
    %616 = vmatprep.mubr.bf16.mxu0 0
    %617 = vmatmul.mubr.bf16.gmra.mrb[0].mxu0 %v395
    %v618 = vpop.f32.mrb[0].mxu0
    %v619 = vadd.f32 0.0, %v618
    %v620 = vpop.f32.mrb[0].mxu0
    %v621 = vpop.f32.mrb[0].mxu0
    %v622 = vadd.f32 0.0, %v621
    %v623 = vpop.f32.mrb[0].mxu0
    %624 = vmatprep.mubr.bf16.mxu0 0
    %625 = vmatmul.mubr.bf16.gmra.mrb[0].mxu0 %v396
    %v626 = vpop.f32.mrb[0].mxu0
    %v627 = vadd.f32 0.0, %v626
    %v628 = vpop.f32.mrb[0].mxu0
    %v629 = vpop.f32.mrb[0].mxu0
    %v630 = vadd.f32 0.0, %v629
    %v631 = vpop.f32.mrb[0].mxu0
    %632 = vmatprep.mubr.bf16.mxu0 0
    %633 = vmatmul.mubr.bf16.gmra.mrb[0].mxu0 %v397
    %v634 = vpop.f32.mrb[0].mxu0
    %v635 = vadd.f32 0.0, %v634
    %v636 = vpop.f32.mrb[0].mxu0
    %v637 = vpop.f32.mrb[0].mxu0
    %v638 = vadd.f32 0.0, %v637
    %v639 = vpop.f32.mrb[0].mxu0
    %640 = vmatprep.mubr.bf16.mxu0 0
    %641 = vmatmul.mubr.bf16.gmra.mrb[0].mxu0 %v398
    %v642 = vpop.f32.mrb[0].mxu0
    %v643 = vadd.f32 0.0, %v642
    %v644 = vpop.f32.mrb[0].mxu0
    %v645 = vpop.f32.mrb[0].mxu0
    %v646 = vadd.f32 0.0, %v645
    %v647 = vpop.f32.mrb[0].mxu0
    %648 = vmatprep.mubr.bf16.mxu0 0
    %649 = vmatmul.mubr.bf16.gmra.mrb[0].mxu0 %v399
    %v650 = vpop.f32.mrb[0].mxu0
    %v651 = vadd.f32 0.0, %v650
    %v652 = vpop.f32.mrb[0].mxu0
    %v653 = vpop.f32.mrb[0].mxu0
    %v654 = vadd.f32 0.0, %v653
    %v655 = vpop.f32.mrb[0].mxu0
    %656 = vmatprep.mubr.bf16.mxu0 0
    %657 = vmatmul.mubr.bf16.gmra.mrb[0].mxu0 %v400
    %v658 = vpop.f32.mrb[0].mxu0
    %v659 = vadd.f32 0.0, %v658
    %v660 = vpop.f32.mrb[0].mxu0
    %v661 = vpop.f32.mrb[0].mxu0
    %v662 = vadd.f32 0.0, %v661
    %v663 = vpop.f32.mrb[0].mxu0
    %664 = vmatprep.mubr.bf16.mxu0 0
    %665 = vmatmul.mubr.bf16.gmra.mrb[0].mxu0 %v401
    %v666 = vpop.f32.mrb[0].mxu0
    %v667 = vadd.f32 0.0, %v666
    %v668 = vpop.f32.mrb[0].mxu0
    %v669 = vpop.f32.mrb[0].mxu0
    %v670 = vadd.f32 0.0, %v669
    %v671 = vpop.f32.mrb[0].mxu0
    %672 = vmatprep.mubr.bf16.mxu0 0
    %673 = vmatmul.mubr.bf16.gmra.mrb[0].mxu0 %v402
    %v674 = vpop.f32.mrb[0].mxu0
    %v675 = vadd.f32 0.0, %v674
    %v676 = vpop.f32.mrb[0].mxu0
    %v677 = vpop.f32.mrb[0].mxu0
    %v678 = vadd.f32 0.0, %v677
    %v679 = vpop.f32.mrb[0].mxu0
    %680 = vmatprep.mubr.bf16.mxu0 0
    %681 = vmatmul.mubr.bf16.gmra.mrb[0].mxu0 %v403
    %v682 = vpop.f32.mrb[0].mxu0
    %v683 = vadd.f32 0.0, %v682
    %v684 = vpop.f32.mrb[0].mxu0
    %v685 = vpop.f32.mrb[0].mxu0
    %v686 = vadd.f32 0.0, %v685
    %v687 = vpop.f32.mrb[0].mxu0
    %688 = vmatprep.mubr.bf16.mxu0 0
    %689 = vmatmul.mubr.bf16.gmra.mrb[0].mxu0 %v404
    %v690 = vpop.f32.mrb[0].mxu0
    %v691 = vadd.f32 0.0, %v690
    %v692 = vpop.f32.mrb[0].mxu0
    %v693 = vpop.f32.mrb[0].mxu0
    %v694 = vadd.f32 0.0, %v693
    %v695 = vpop.f32.mrb[0].mxu0
    %696 = vmatprep.mubr.bf16.mxu0 0
    %697 = vmatmul.mubr.bf16.gmra.mrb[0].mxu0 %v405
    %v698 = vpop.f32.mrb[0].mxu0
    %v699 = vadd.f32 0.0, %v698
    %v700 = vpop.f32.mrb[0].mxu0
    %v701 = vpop.f32.mrb[0].mxu0
    %v702 = vadd.f32 0.0, %v701
    %v703 = vpop.f32.mrb[0].mxu0
    %704 = vmatprep.mubr.bf16.mxu0 0
    %705 = vmatmul.mubr.bf16.gmra.mrb[0].mxu0 %v406
    %v706 = vpop.f32.mrb[0].mxu0
    %v707 = vadd.f32 0.0, %v706
    %v708 = vpop.f32.mrb[0].mxu0
    %v709 = vpop.f32.mrb[0].mxu0
    %v710 = vadd.f32 0.0, %v709
    %v711 = vpop.f32.mrb[0].mxu0
    %712 = vmatprep.mubr.bf16.mxu0 0
    %713 = vmatmul.mubr.bf16.gmra.mrb[0].mxu0 %v407
    %v714 = vpop.f32.mrb[0].mxu0
    %v715 = vadd.f32 0.0, %v714
    %v716 = vpop.f32.mrb[0].mxu0
    %v717 = vpop.f32.mrb[0].mxu0
    %v718 = vadd.f32 0.0, %v717
    %v719 = vpop.f32.mrb[0].mxu0
    %720 = vmatprep.mubr.bf16.mxu0 0
    %721 = vmatmul.mubr.bf16.gmra.mrb[0].mxu0 %v408
    %v722 = vpop.f32.mrb[0].mxu0
    %v723 = vadd.f32 0.0, %v722
    %v724 = vpop.f32.mrb[0].mxu0
    %v725 = vpop.f32.mrb[0].mxu0
    %v726 = vadd.f32 0.0, %v725
    %v727 = vpop.f32.mrb[0].mxu0
    %728 = vmatprep.mubr.bf16.mxu0 0
    %729 = vmatmul.mubr.bf16.gmra.mrb[0].mxu0 %v409
    %v730 = vpop.f32.mrb[0].mxu0
    %v731 = vadd.f32 0.0, %v730
    %v732 = vpop.f32.mrb[0].mxu0
    %v733 = vpop.f32.mrb[0].mxu0
    %v734 = vadd.f32 0.0, %v733
    %v735 = vpop.f32.mrb[0].mxu0
    %736 = vmatprep.mubr.bf16.mxu0 0
    %737 = vmatmul.mubr.bf16.gmra.mrb[0].mxu0 %v410
    %v738 = vpop.f32.mrb[0].mxu0
    %v739 = vadd.f32 0.0, %v738
    %v740 = vpop.f32.mrb[0].mxu0
    %v741 = vpop.f32.mrb[0].mxu0
    %v742 = vadd.f32 0.0, %v741
    %v743 = vpop.f32.mrb[0].mxu0
    %744 = vmatprep.mubr.bf16.mxu0 0
    %745 = vmatmul.mubr.bf16.gmra.mrb[0].mxu0 %v411
    %v746 = vpop.f32.mrb[0].mxu0
    %v747 = vadd.f32 0.0, %v746
    %v748 = vpop.f32.mrb[0].mxu0
    %v749 = vpop.f32.mrb[0].mxu0
    %v750 = vadd.f32 0.0, %v749
    %v751 = vpop.f32.mrb[0].mxu0
    %752 = vmatprep.mubr.bf16.mxu0 0
    %753 = vmatmul.mubr.bf16.gmra.mrb[0].mxu0 %v412
    %v754 = vpop.f32.mrb[0].mxu0
    %v755 = vadd.f32 0.0, %v754
    %v756 = vpop.f32.mrb[0].mxu0
    %v757 = vpop.f32.mrb[0].mxu0
    %v758 = vadd.f32 0.0, %v757
    %v759 = vpop.f32.mrb[0].mxu0
    %760 = vmatprep.mubr.bf16.mxu0 0
    %761 = vmatmul.mubr.bf16.gmra.mrb[0].mxu0 %v413
    %v762 = vpop.f32.mrb[0].mxu0
    %v763 = vadd.f32 0.0, %v762
    %v764 = vpop.f32.mrb[0].mxu0
    %v765 = vpop.f32.mrb[0].mxu0
    %v766 = vadd.f32 0.0, %v765
    %v767 = vpop.f32.mrb[0].mxu0
    %768 = vmatprep.mubr.bf16.mxu0 0
    %769 = vmatmul.mubr.bf16.gmra.mrb[0].mxu0 %v414
    %v770 = vpop.f32.mrb[0].mxu0
    %v771 = vadd.f32 0.0, %v770
    %v772 = vpop.f32.mrb[0].mxu0
    %v773 = vpop.f32.mrb[0].mxu0
    %v774 = vadd.f32 0.0, %v773
    %v775 = vpop.f32.mrb[0].mxu0
    %776 = vmatprep.mubr.bf16.mxu0 0
    %777 = vmatmul.mubr.bf16.gmra.mrb[0].mxu0 %v415
    %v778 = vpop.f32.mrb[0].mxu0
    %v779 = vadd.f32 0.0, %v778
    %v780 = vpop.f32.mrb[0].mxu0
    %v781 = vpop.f32.mrb[0].mxu0
    %v782 = vadd.f32 0.0, %v781
    %v783 = vpop.f32.mrb[0].mxu0
    %784 = vdwg.mxu0
    %v785 = vadd.f32 %v176, %v531
    %v786 = vadd.f32 %v177, %v534
    %v787 = vadd.f32 %v178, %v539
    %v788 = vadd.f32 %v179, %v542
    %v789 = vadd.f32 %v180, %v547
    %v790 = vadd.f32 %v181, %v550
    %v791 = vadd.f32 %v182, %v555
    %v792 = vadd.f32 %v183, %v558
    %v793 = vadd.f32 %v184, %v563
    %v794 = vadd.f32 %v185, %v566
    %v795 = vadd.f32 %v186, %v571
    %v796 = vadd.f32 %v187, %v574
    %v797 = vadd.f32 %v188, %v579
    %v798 = vadd.f32 %v189, %v582
    %v799 = vadd.f32 %v190, %v587
    %v800 = vadd.f32 %v191, %v590
    %v801 = vadd.f32 %v192, %v595
    %v802 = vadd.f32 %v193, %v598
    %v803 = vadd.f32 %v194, %v603
    %v804 = vadd.f32 %v195, %v606
    %v805 = vadd.f32 %v196, %v611
    %v806 = vadd.f32 %v197, %v614
    %v807 = vadd.f32 %v198, %v619
    %v808 = vadd.f32 %v199, %v622
    %v809 = vadd.f32 %v200, %v627
    %v810 = vadd.f32 %v201, %v630
    %v811 = vadd.f32 %v202, %v635
    %v812 = vadd.f32 %v203, %v638
    %v813 = vadd.f32 %v204, %v643
    %v814 = vadd.f32 %v205, %v646
    %v815 = vadd.f32 %v206, %v651
    %v816 = vadd.f32 %v207, %v654
    %v817 = vadd.f32 %v208, %v659
    %v818 = vadd.f32 %v209, %v662
    %v819 = vadd.f32 %v210, %v667
    %v820 = vadd.f32 %v211, %v670
    %v821 = vadd.f32 %v212, %v675
    %v822 = vadd.f32 %v213, %v678
    %v823 = vadd.f32 %v214, %v683
    %v824 = vadd.f32 %v215, %v686
    %v825 = vadd.f32 %v216, %v691
    %v826 = vadd.f32 %v217, %v694
    %v827 = vadd.f32 %v218, %v699
    %v828 = vadd.f32 %v219, %v702
    %v829 = vadd.f32 %v220, %v707
    %v830 = vadd.f32 %v221, %v710
    %v831 = vadd.f32 %v222, %v715
    %v832 = vadd.f32 %v223, %v718
    %v833 = vadd.f32 %v224, %v723
    %v834 = vadd.f32 %v225, %v726
    %v835 = vadd.f32 %v226, %v731
    %v836 = vadd.f32 %v227, %v734
    %v837 = vadd.f32 %v228, %v739
    %v838 = vadd.f32 %v229, %v742
    %v839 = vadd.f32 %v230, %v747
    %v840 = vadd.f32 %v231, %v750
    %v841 = vadd.f32 %v232, %v755
    %v842 = vadd.f32 %v233, %v758
    %v843 = vadd.f32 %v234, %v763
    %v844 = vadd.f32 %v235, %v766
    %v845 = vadd.f32 %v236, %v771
    %v846 = vadd.f32 %v237, %v774
    %v847 = vadd.f32 %v238, %v779
    %v848 = vadd.f32 %v239, %v782
    %849 = vst [vmem:[#allocation2] sm:$0xff] %v785
    %850 = vst [vmem:[#allocation2 + $0x8] sm:$0xff] %v786
    %851 = vst [vmem:[#allocation2 + $0x10] sm:$0xff] %v787
    %852 = vst [vmem:[#allocation2 + $0x18] sm:$0xff] %v788
    %853 = vst [vmem:[#allocation2 + $0x20] sm:$0xff] %v789
    %854 = vst [vmem:[#allocation2 + $0x28] sm:$0xff] %v790
    %855 = vst [vmem:[#allocation2 + $0x30] sm:$0xff] %v791
    %856 = vst [vmem:[#allocation2 + $0x38] sm:$0xff] %v792
    %857 = vst [vmem:[#allocation2 + $0x40] sm:$0xff] %v793
    %858 = vst [vmem:[#allocation2 + $0x48] sm:$0xff] %v794
    %859 = vst [vmem:[#allocation2 + $0x50] sm:$0xff] %v795
    %860 = vst [vmem:[#allocation2 + $0x58] sm:$0xff] %v796
    %861 = vst [vmem:[#allocation2 + $0x60] sm:$0xff] %v797
    %862 = vst [vmem:[#allocation2 + $0x68] sm:$0xff] %v798
    %863 = vst [vmem:[#allocation2 + $0x70] sm:$0xff] %v799
    %864 = vst [vmem:[#allocation2 + $0x78] sm:$0xff] %v800
    %865 = vst [vmem:[#allocation2 + $0x80] sm:$0xff] %v801
    %866 = vst [vmem:[#allocation2 + $0x88] sm:$0xff] %v802
    %867 = vst [vmem:[#allocation2 + $0x90] sm:$0xff] %v803
    %868 = vst [vmem:[#allocation2 + $0x98] sm:$0xff] %v804
    %869 = vst [vmem:[#allocation2 + $0xa0] sm:$0xff] %v805
    %870 = vst [vmem:[#allocation2 + $0xa8] sm:$0xff] %v806
    %871 = vst [vmem:[#allocation2 + $0xb0] sm:$0xff] %v807
    %872 = vst [vmem:[#allocation2 + $0xb8] sm:$0xff] %v808
    %873 = vst [vmem:[#allocation2 + $0xc0] sm:$0xff] %v809
    %874 = vst [vmem:[#allocation2 + $0xc8] sm:$0xff] %v810
    %875 = vst [vmem:[#allocation2 + $0xd0] sm:$0xff] %v811
    %876 = vst [vmem:[#allocation2 + $0xd8] sm:$0xff] %v812
    %877 = vst [vmem:[#allocation2 + $0xe0] sm:$0xff] %v813
    %878 = vst [vmem:[#allocation2 + $0xe8] sm:$0xff] %v814
    %879 = vst [vmem:[#allocation2 + $0xf0] sm:$0xff] %v815
    %880 = vst [vmem:[#allocation2 + $0xf8] sm:$0xff] %v816
    %881 = vst [vmem:[#allocation2 + $0x100] sm:$0xff] %v817
    %882 = vst [vmem:[#allocation2 + $0x108] sm:$0xff] %v818
    %883 = vst [vmem:[#allocation2 + $0x110] sm:$0xff] %v819
    %884 = vst [vmem:[#allocation2 + $0x118] sm:$0xff] %v820
    %885 = vst [vmem:[#allocation2 + $0x120] sm:$0xff] %v821
    %886 = vst [vmem:[#allocation2 + $0x128] sm:$0xff] %v822
    %887 = vst [vmem:[#allocation2 + $0x130] sm:$0xff] %v823
    %888 = vst [vmem:[#allocation2 + $0x138] sm:$0xff] %v824
    %889 = vst [vmem:[#allocation2 + $0x140] sm:$0xff] %v825
    %890 = vst [vmem:[#allocation2 + $0x148] sm:$0xff] %v826
    %891 = vst [vmem:[#allocation2 + $0x150] sm:$0xff] %v827
    %892 = vst [vmem:[#allocation2 + $0x158] sm:$0xff] %v828
    %893 = vst [vmem:[#allocation2 + $0x160] sm:$0xff] %v829
    %894 = vst [vmem:[#allocation2 + $0x168] sm:$0xff] %v830
    %895 = vst [vmem:[#allocation2 + $0x170] sm:$0xff] %v831
    %896 = vst [vmem:[#allocation2 + $0x178] sm:$0xff] %v832
    %897 = vst [vmem:[#allocation2 + $0x180] sm:$0xff] %v833
    %898 = vst [vmem:[#allocation2 + $0x188] sm:$0xff] %v834
    %899 = vst [vmem:[#allocation2 + $0x190] sm:$0xff] %v835
    %900 = vst [vmem:[#allocation2 + $0x198] sm:$0xff] %v836
    %901 = vst [vmem:[#allocation2 + $0x1a0] sm:$0xff] %v837
    %902 = vst [vmem:[#allocation2 + $0x1a8] sm:$0xff] %v838
    %903 = vst [vmem:[#allocation2 + $0x1b0] sm:$0xff] %v839
    %904 = vst [vmem:[#allocation2 + $0x1b8] sm:$0xff] %v840
    %905 = vst [vmem:[#allocation2 + $0x1c0] sm:$0xff] %v841
    %906 = vst [vmem:[#allocation2 + $0x1c8] sm:$0xff] %v842
    %907 = vst [vmem:[#allocation2 + $0x1d0] sm:$0xff] %v843
    %908 = vst [vmem:[#allocation2 + $0x1d8] sm:$0xff] %v844
    %909 = vst [vmem:[#allocation2 + $0x1e0] sm:$0xff] %v845
    %910 = vst [vmem:[#allocation2 + $0x1e8] sm:$0xff] %v846
    %911 = vst [vmem:[#allocation2 + $0x1f0] sm:$0xff] %v847
    %912 = vst [vmem:[#allocation2 + $0x1f8] sm:$0xff] %v848
    // Predicated region
    $region26: #{tpu_custom_call.1} parent=1 // pred_check
      %p913 = pneg %p44
    $region27: #{tpu_custom_call.1} parent=1 // pred_check_branch
      %915 = sbr.rel (%p913) target = $region29
    $region28: #{tpu_custom_call.1} parent=1 // pred_region
      %v916 = vld [vmem:[#allocation2] sm:$0xff]
      %v917 = vld [vmem:[#allocation2 + $0x8] sm:$0xff]
      %v918 = vld [vmem:[#allocation2 + $0x10] sm:$0xff]
      %v919 = vld [vmem:[#allocation2 + $0x18] sm:$0xff]
      %v920 = vld [vmem:[#allocation2 + $0x20] sm:$0xff]
      %v921 = vld [vmem:[#allocation2 + $0x28] sm:$0xff]
      %v922 = vld [vmem:[#allocation2 + $0x30] sm:$0xff]
      %v923 = vld [vmem:[#allocation2 + $0x38] sm:$0xff]
      %v924 = vld [vmem:[#allocation2 + $0x40] sm:$0xff]
      %v925 = vld [vmem:[#allocation2 + $0x48] sm:$0xff]
      %v926 = vld [vmem:[#allocation2 + $0x50] sm:$0xff]
      %v927 = vld [vmem:[#allocation2 + $0x58] sm:$0xff]
      %v928 = vld [vmem:[#allocation2 + $0x60] sm:$0xff]
      %v929 = vld [vmem:[#allocation2 + $0x68] sm:$0xff]
      %v930 = vld [vmem:[#allocation2 + $0x70] sm:$0xff]
      %v931 = vld [vmem:[#allocation2 + $0x78] sm:$0xff]
      %v932 = vld [vmem:[#allocation2 + $0x80] sm:$0xff]
      %v933 = vld [vmem:[#allocation2 + $0x88] sm:$0xff]
      %v934 = vld [vmem:[#allocation2 + $0x90] sm:$0xff]
      %v935 = vld [vmem:[#allocation2 + $0x98] sm:$0xff]
      %v936 = vld [vmem:[#allocation2 + $0xa0] sm:$0xff]
      %v937 = vld [vmem:[#allocation2 + $0xa8] sm:$0xff]
      %v938 = vld [vmem:[#allocation2 + $0xb0] sm:$0xff]
      %v939 = vld [vmem:[#allocation2 + $0xb8] sm:$0xff]
      %v940 = vld [vmem:[#allocation2 + $0xc0] sm:$0xff]
      %v941 = vld [vmem:[#allocation2 + $0xc8] sm:$0xff]
      %v942 = vld [vmem:[#allocation2 + $0xd0] sm:$0xff]
      %v943 = vld [vmem:[#allocation2 + $0xd8] sm:$0xff]
      %v944 = vld [vmem:[#allocation2 + $0xe0] sm:$0xff]
      %v945 = vld [vmem:[#allocation2 + $0xe8] sm:$0xff]
      %v946 = vld [vmem:[#allocation2 + $0xf0] sm:$0xff]
      %v947 = vld [vmem:[#allocation2 + $0xf8] sm:$0xff]
      %v948 = vld [vmem:[#allocation2 + $0x100] sm:$0xff]
      %v949 = vld [vmem:[#allocation2 + $0x108] sm:$0xff]
      %v950 = vld [vmem:[#allocation2 + $0x110] sm:$0xff]
      %v951 = vld [vmem:[#allocation2 + $0x118] sm:$0xff]
      %v952 = vld [vmem:[#allocation2 + $0x120] sm:$0xff]
      %v953 = vld [vmem:[#allocation2 + $0x128] sm:$0xff]
      %v954 = vld [vmem:[#allocation2 + $0x130] sm:$0xff]
      %v955 = vld [vmem:[#allocation2 + $0x138] sm:$0xff]
      %v956 = vld [vmem:[#allocation2 + $0x140] sm:$0xff]
      %v957 = vld [vmem:[#allocation2 + $0x148] sm:$0xff]
      %v958 = vld [vmem:[#allocation2 + $0x150] sm:$0xff]
      %v959 = vld [vmem:[#allocation2 + $0x158] sm:$0xff]
      %v960 = vld [vmem:[#allocation2 + $0x160] sm:$0xff]
      %v961 = vld [vmem:[#allocation2 + $0x168] sm:$0xff]
      %v962 = vld [vmem:[#allocation2 + $0x170] sm:$0xff]
      %v963 = vld [vmem:[#allocation2 + $0x178] sm:$0xff]
      %v964 = vld [vmem:[#allocation2 + $0x180] sm:$0xff]
      %v965 = vld [vmem:[#allocation2 + $0x188] sm:$0xff]
      %v966 = vld [vmem:[#allocation2 + $0x190] sm:$0xff]
      %v967 = vld [vmem:[#allocation2 + $0x198] sm:$0xff]
      %v968 = vld [vmem:[#allocation2 + $0x1a0] sm:$0xff]
      %v969 = vld [vmem:[#allocation2 + $0x1a8] sm:$0xff]
      %v970 = vld [vmem:[#allocation2 + $0x1b0] sm:$0xff]
      %v971 = vld [vmem:[#allocation2 + $0x1b8] sm:$0xff]
      %v972 = vld [vmem:[#allocation2 + $0x1c0] sm:$0xff]
      %v973 = vld [vmem:[#allocation2 + $0x1c8] sm:$0xff]
      %v974 = vld [vmem:[#allocation2 + $0x1d0] sm:$0xff]
      %v975 = vld [vmem:[#allocation2 + $0x1d8] sm:$0xff]
      %v976 = vld [vmem:[#allocation2 + $0x1e0] sm:$0xff]
      %v977 = vld [vmem:[#allocation2 + $0x1e8] sm:$0xff]
      %v978 = vld [vmem:[#allocation2 + $0x1f0] sm:$0xff]
      %v979 = vld [vmem:[#allocation2 + $0x1f8] sm:$0xff]
      %v980 = vld [vmem:[%s2] sm:$0x1]
      %v982 = vlaneseq
      %v983 = vshrl.u32 %v982, 7
      %v984 = vsub.s32 0, %v983
      %v985 = vrot.slane %v980, %v984
      %v987 = vadd.f32 %v916, %v985
      %v988 = vadd.f32 %v917, %v985
      %v989 = vadd.f32 %v918, %v985
      %v990 = vadd.f32 %v919, %v985
      %v991 = vadd.f32 %v920, %v985
      %v992 = vadd.f32 %v921, %v985
      %v993 = vadd.f32 %v922, %v985
      %v994 = vadd.f32 %v923, %v985
      %v995 = vadd.f32 %v924, %v985
      %v996 = vadd.f32 %v925, %v985
      %v997 = vadd.f32 %v926, %v985
      %v998 = vadd.f32 %v927, %v985
      %v999 = vadd.f32 %v928, %v985
      %v1000 = vadd.f32 %v929, %v985
      %v1001 = vadd.f32 %v930, %v985
      %v1002 = vadd.f32 %v931, %v985
      %v1003 = vadd.f32 %v932, %v985
      %v1004 = vadd.f32 %v933, %v985
      %v1005 = vadd.f32 %v934, %v985
      %v1006 = vadd.f32 %v935, %v985
      %v1007 = vadd.f32 %v936, %v985
      %v1008 = vadd.f32 %v937, %v985
      %v1009 = vadd.f32 %v938, %v985
      %v1010 = vadd.f32 %v939, %v985
      %v1011 = vadd.f32 %v940, %v985
      %v1012 = vadd.f32 %v941, %v985
      %v1013 = vadd.f32 %v942, %v985
      %v1014 = vadd.f32 %v943, %v985
      %v1015 = vadd.f32 %v944, %v985
      %v1016 = vadd.f32 %v945, %v985
      %v1017 = vadd.f32 %v946, %v985
      %v1018 = vadd.f32 %v947, %v985
      %v1019 = vadd.f32 %v948, %v985
      %v1020 = vadd.f32 %v949, %v985
      %v1021 = vadd.f32 %v950, %v985
      %v1022 = vadd.f32 %v951, %v985
      %v1023 = vadd.f32 %v952, %v985
      %v1024 = vadd.f32 %v953, %v985
      %v1025 = vadd.f32 %v954, %v985
      %v1026 = vadd.f32 %v955, %v985
      %v1027 = vadd.f32 %v956, %v985
      %v1028 = vadd.f32 %v957, %v985
      %v1029 = vadd.f32 %v958, %v985
      %v1030 = vadd.f32 %v959, %v985
      %v1031 = vadd.f32 %v960, %v985
      %v1032 = vadd.f32 %v961, %v985
      %v1033 = vadd.f32 %v962, %v985
      %v1034 = vadd.f32 %v963, %v985
      %v1035 = vadd.f32 %v964, %v985
      %v1036 = vadd.f32 %v965, %v985
      %v1037 = vadd.f32 %v966, %v985
      %v1038 = vadd.f32 %v967, %v985
      %v1039 = vadd.f32 %v968, %v985
      %v1040 = vadd.f32 %v969, %v985
      %v1041 = vadd.f32 %v970, %v985
      %v1042 = vadd.f32 %v971, %v985
      %v1043 = vadd.f32 %v972, %v985
      %v1044 = vadd.f32 %v973, %v985
      %v1045 = vadd.f32 %v974, %v985
      %v1046 = vadd.f32 %v975, %v985
      %v1047 = vadd.f32 %v976, %v985
      %v1048 = vadd.f32 %v977, %v985
      %v1049 = vadd.f32 %v978, %v985
      %v1050 = vadd.f32 %v979, %v985
      %v1051 = vpack.c.bf16 %v988, %v987
      %v1052 = vpack.c.bf16 %v990, %v989
      %v1053 = vpack.c.bf16 %v992, %v991
      %v1054 = vpack.c.bf16 %v994, %v993
      %v1055 = vpack.c.bf16 %v996, %v995
      %v1056 = vpack.c.bf16 %v998, %v997
      %v1057 = vpack.c.bf16 %v1000, %v999
      %v1058 = vpack.c.bf16 %v1002, %v1001
      %v1059 = vpack.c.bf16 %v1004, %v1003
      %v1060 = vpack.c.bf16 %v1006, %v1005
      %v1061 = vpack.c.bf16 %v1008, %v1007
      %v1062 = vpack.c.bf16 %v1010, %v1009
      %v1063 = vpack.c.bf16 %v1012, %v1011
      %v1064 = vpack.c.bf16 %v1014, %v1013
      %v1065 = vpack.c.bf16 %v1016, %v1015
      %v1066 = vpack.c.bf16 %v1018, %v1017
      %v1067 = vpack.c.bf16 %v1020, %v1019
      %v1068 = vpack.c.bf16 %v1022, %v1021
      %v1069 = vpack.c.bf16 %v1024, %v1023
      %v1070 = vpack.c.bf16 %v1026, %v1025
      %v1071 = vpack.c.bf16 %v1028, %v1027
      %v1072 = vpack.c.bf16 %v1030, %v1029
      %v1073 = vpack.c.bf16 %v1032, %v1031
      %v1074 = vpack.c.bf16 %v1034, %v1033
      %v1075 = vpack.c.bf16 %v1036, %v1035
      %v1076 = vpack.c.bf16 %v1038, %v1037
      %v1077 = vpack.c.bf16 %v1040, %v1039
      %v1078 = vpack.c.bf16 %v1042, %v1041
      %v1079 = vpack.c.bf16 %v1044, %v1043
      %v1080 = vpack.c.bf16 %v1046, %v1045
      %v1081 = vpack.c.bf16 %v1048, %v1047
      %v1082 = vpack.c.bf16 %v1050, %v1049
      %v1115 = vunpack.c.l.b16 %v1051
      %v1116 = vunpack.c.h.b16 %v1051
      %v1117 = vunpack.c.l.b16 %v1052
      %v1118 = vunpack.c.h.b16 %v1052
      %v1119 = vunpack.c.l.b16 %v1053
      %v1120 = vunpack.c.h.b16 %v1053
      %v1121 = vunpack.c.l.b16 %v1054
      %v1122 = vunpack.c.h.b16 %v1054
      %v1123 = vunpack.c.l.b16 %v1055
      %v1124 = vunpack.c.h.b16 %v1055
      %v1125 = vunpack.c.l.b16 %v1056
      %v1126 = vunpack.c.h.b16 %v1056
      %v1127 = vunpack.c.l.b16 %v1057
      %v1128 = vunpack.c.h.b16 %v1057
      %v1129 = vunpack.c.l.b16 %v1058
      %v1130 = vunpack.c.h.b16 %v1058
      %v1131 = vunpack.c.l.b16 %v1059
      %v1132 = vunpack.c.h.b16 %v1059
      %v1133 = vunpack.c.l.b16 %v1060
      %v1134 = vunpack.c.h.b16 %v1060
      %v1135 = vunpack.c.l.b16 %v1061
      %v1136 = vunpack.c.h.b16 %v1061
      %v1137 = vunpack.c.l.b16 %v1062
      %v1138 = vunpack.c.h.b16 %v1062
      %v1139 = vunpack.c.l.b16 %v1063
      %v1140 = vunpack.c.h.b16 %v1063
      %v1141 = vunpack.c.l.b16 %v1064
      %v1142 = vunpack.c.h.b16 %v1064
      %v1143 = vunpack.c.l.b16 %v1065
      %v1144 = vunpack.c.h.b16 %v1065
      %v1145 = vunpack.c.l.b16 %v1066
      %v1146 = vunpack.c.h.b16 %v1066
      %v1147 = vunpack.c.l.b16 %v1067
      %v1148 = vunpack.c.h.b16 %v1067
      %v1149 = vunpack.c.l.b16 %v1068
      %v1150 = vunpack.c.h.b16 %v1068
      %v1151 = vunpack.c.l.b16 %v1069
      %v1152 = vunpack.c.h.b16 %v1069
      %v1153 = vunpack.c.l.b16 %v1070
      %v1154 = vunpack.c.h.b16 %v1070
      %v1155 = vunpack.c.l.b16 %v1071
      %v1156 = vunpack.c.h.b16 %v1071
      %v1157 = vunpack.c.l.b16 %v1072
      %v1158 = vunpack.c.h.b16 %v1072
      %v1159 = vunpack.c.l.b16 %v1073
      %v1160 = vunpack.c.h.b16 %v1073
      %v1161 = vunpack.c.l.b16 %v1074
      %v1162 = vunpack.c.h.b16 %v1074
      %v1163 = vunpack.c.l.b16 %v1075
      %v1164 = vunpack.c.h.b16 %v1075
      %v1165 = vunpack.c.l.b16 %v1076
      %v1166 = vunpack.c.h.b16 %v1076
      %v1167 = vunpack.c.l.b16 %v1077
      %v1168 = vunpack.c.h.b16 %v1077
      %v1169 = vunpack.c.l.b16 %v1078
      %v1170 = vunpack.c.h.b16 %v1078
      %v1171 = vunpack.c.l.b16 %v1079
      %v1172 = vunpack.c.h.b16 %v1079
      %v1173 = vunpack.c.l.b16 %v1080
      %v1174 = vunpack.c.h.b16 %v1080
      %v1175 = vunpack.c.l.b16 %v1081
      %v1176 = vunpack.c.h.b16 %v1081
      %v1177 = vunpack.c.l.b16 %v1082
      %v1178 = vunpack.c.h.b16 %v1082
      %v1179 = vpack.c.b16 %v1115, %v1115
      %v1180 = vpack.c.b16 %v1116, %v1116
      %v1181 = vpack.c.b16 %v1117, %v1117
      %v1182 = vpack.c.b16 %v1118, %v1118
      %v1183 = vpack.c.b16 %v1119, %v1119
      %v1184 = vpack.c.b16 %v1120, %v1120
      %v1185 = vpack.c.b16 %v1121, %v1121
      %v1186 = vpack.c.b16 %v1122, %v1122
      %v1187 = vpack.c.b16 %v1123, %v1123
      %v1188 = vpack.c.b16 %v1124, %v1124
      %v1189 = vpack.c.b16 %v1125, %v1125
      %v1190 = vpack.c.b16 %v1126, %v1126
      %v1191 = vpack.c.b16 %v1127, %v1127
      %v1192 = vpack.c.b16 %v1128, %v1128
      %v1193 = vpack.c.b16 %v1129, %v1129
      %v1194 = vpack.c.b16 %v1130, %v1130
      %v1195 = vpack.c.b16 %v1131, %v1131
      %v1196 = vpack.c.b16 %v1132, %v1132
      %v1197 = vpack.c.b16 %v1133, %v1133
      %v1198 = vpack.c.b16 %v1134, %v1134
      %v1199 = vpack.c.b16 %v1135, %v1135
      %v1200 = vpack.c.b16 %v1136, %v1136
      %v1201 = vpack.c.b16 %v1137, %v1137
      %v1202 = vpack.c.b16 %v1138, %v1138
      %v1203 = vpack.c.b16 %v1139, %v1139
      %v1204 = vpack.c.b16 %v1140, %v1140
      %v1205 = vpack.c.b16 %v1141, %v1141
      %v1206 = vpack.c.b16 %v1142, %v1142
      %v1207 = vpack.c.b16 %v1143, %v1143
      %v1208 = vpack.c.b16 %v1144, %v1144
      %v1209 = vpack.c.b16 %v1145, %v1145
      %v1210 = vpack.c.b16 %v1146, %v1146
      %v1211 = vpack.c.b16 %v1147, %v1147
      %v1212 = vpack.c.b16 %v1148, %v1148
      %v1213 = vpack.c.b16 %v1149, %v1149
      %v1214 = vpack.c.b16 %v1150, %v1150
      %v1215 = vpack.c.b16 %v1151, %v1151
      %v1216 = vpack.c.b16 %v1152, %v1152
      %v1217 = vpack.c.b16 %v1153, %v1153
      %v1218 = vpack.c.b16 %v1154, %v1154
      %v1219 = vpack.c.b16 %v1155, %v1155
      %v1220 = vpack.c.b16 %v1156, %v1156
      %v1221 = vpack.c.b16 %v1157, %v1157
      %v1222 = vpack.c.b16 %v1158, %v1158
      %v1223 = vpack.c.b16 %v1159, %v1159
      %v1224 = vpack.c.b16 %v1160, %v1160
      %v1225 = vpack.c.b16 %v1161, %v1161
      %v1226 = vpack.c.b16 %v1162, %v1162
      %v1227 = vpack.c.b16 %v1163, %v1163
      %v1228 = vpack.c.b16 %v1164, %v1164
      %v1229 = vpack.c.b16 %v1165, %v1165
      %v1230 = vpack.c.b16 %v1166, %v1166
      %v1231 = vpack.c.b16 %v1167, %v1167
      %v1232 = vpack.c.b16 %v1168, %v1168
      %v1233 = vpack.c.b16 %v1169, %v1169
      %v1234 = vpack.c.b16 %v1170, %v1170
      %v1235 = vpack.c.b16 %v1171, %v1171
      %v1236 = vpack.c.b16 %v1172, %v1172
      %v1237 = vpack.c.b16 %v1173, %v1173
      %v1238 = vpack.c.b16 %v1174, %v1174
      %v1239 = vpack.c.b16 %v1175, %v1175
      %v1240 = vpack.c.b16 %v1176, %v1176
      %v1241 = vpack.c.b16 %v1177, %v1177
      %v1242 = vpack.c.b16 %v1178, %v1178
      %1307 = vst [vmem:[#allocation8] sm:$0xf] %v1179
      %1308 = vst [vmem:[#allocation8 + $0x4] sm:$0xf] %v1180
      %1309 = vst [vmem:[#allocation8 + $0x8] sm:$0xf] %v1181
      %1310 = vst [vmem:[#allocation8 + $0xc] sm:$0xf] %v1182
      %1311 = vst [vmem:[#allocation8 + $0x10] sm:$0xf] %v1183
      %1312 = vst [vmem:[#allocation8 + $0x14] sm:$0xf] %v1184
      %1313 = vst [vmem:[#allocation8 + $0x18] sm:$0xf] %v1185
      %1314 = vst [vmem:[#allocation8 + $0x1c] sm:$0xf] %v1186
      %1315 = vst [vmem:[#allocation8 + $0x20] sm:$0xf] %v1187
      %1316 = vst [vmem:[#allocation8 + $0x24] sm:$0xf] %v1188
      %1317 = vst [vmem:[#allocation8 + $0x28] sm:$0xf] %v1189
      %1318 = vst [vmem:[#allocation8 + $0x2c] sm:$0xf] %v1190
      %1319 = vst [vmem:[#allocation8 + $0x30] sm:$0xf] %v1191
      %1320 = vst [vmem:[#allocation8 + $0x34] sm:$0xf] %v1192
      %1321 = vst [vmem:[#allocation8 + $0x38] sm:$0xf] %v1193
      %1322 = vst [vmem:[#allocation8 + $0x3c] sm:$0xf] %v1194
      %1323 = vst [vmem:[#allocation8 + $0x40] sm:$0xf] %v1195
      %1324 = vst [vmem:[#allocation8 + $0x44] sm:$0xf] %v1196
      %1325 = vst [vmem:[#allocation8 + $0x48] sm:$0xf] %v1197
      %1326 = vst [vmem:[#allocation8 + $0x4c] sm:$0xf] %v1198
      %1327 = vst [vmem:[#allocation8 + $0x50] sm:$0xf] %v1199
      %1328 = vst [vmem:[#allocation8 + $0x54] sm:$0xf] %v1200
      %1329 = vst [vmem:[#allocation8 + $0x58] sm:$0xf] %v1201
      %1330 = vst [vmem:[#allocation8 + $0x5c] sm:$0xf] %v1202
      %1331 = vst [vmem:[#allocation8 + $0x60] sm:$0xf] %v1203
      %1332 = vst [vmem:[#allocation8 + $0x64] sm:$0xf] %v1204
      %1333 = vst [vmem:[#allocation8 + $0x68] sm:$0xf] %v1205
      %1334 = vst [vmem:[#allocation8 + $0x6c] sm:$0xf] %v1206
      %1335 = vst [vmem:[#allocation8 + $0x70] sm:$0xf] %v1207
      %1336 = vst [vmem:[#allocation8 + $0x74] sm:$0xf] %v1208
      %1337 = vst [vmem:[#allocation8 + $0x78] sm:$0xf] %v1209
      %1338 = vst [vmem:[#allocation8 + $0x7c] sm:$0xf] %v1210
      %1339 = vst [vmem:[#allocation8 + $0x80] sm:$0xf] %v1211
      %1340 = vst [vmem:[#allocation8 + $0x84] sm:$0xf] %v1212
      %1341 = vst [vmem:[#allocation8 + $0x88] sm:$0xf] %v1213
      %1342 = vst [vmem:[#allocation8 + $0x8c] sm:$0xf] %v1214
      %1343 = vst [vmem:[#allocation8 + $0x90] sm:$0xf] %v1215
      %1344 = vst [vmem:[#allocation8 + $0x94] sm:$0xf] %v1216
      %1345 = vst [vmem:[#allocation8 + $0x98] sm:$0xf] %v1217
      %1346 = vst [vmem:[#allocation8 + $0x9c] sm:$0xf] %v1218
      %1347 = vst [vmem:[#allocation8 + $0xa0] sm:$0xf] %v1219
      %1348 = vst [vmem:[#allocation8 + $0xa4] sm:$0xf] %v1220
      %1349 = vst [vmem:[#allocation8 + $0xa8] sm:$0xf] %v1221
      %1350 = vst [vmem:[#allocation8 + $0xac] sm:$0xf] %v1222
      %1351 = vst [vmem:[#allocation8 + $0xb0] sm:$0xf] %v1223
      %1352 = vst [vmem:[#allocation8 + $0xb4] sm:$0xf] %v1224
      %1353 = vst [vmem:[#allocation8 + $0xb8] sm:$0xf] %v1225
      %1354 = vst [vmem:[#allocation8 + $0xbc] sm:$0xf] %v1226
      %1355 = vst [vmem:[#allocation8 + $0xc0] sm:$0xf] %v1227
      %1356 = vst [vmem:[#allocation8 + $0xc4] sm:$0xf] %v1228
      %1357 = vst [vmem:[#allocation8 + $0xc8] sm:$0xf] %v1229
      %1358 = vst [vmem:[#allocation8 + $0xcc] sm:$0xf] %v1230
      %1359 = vst [vmem:[#allocation8 + $0xd0] sm:$0xf] %v1231
      %1360 = vst [vmem:[#allocation8 + $0xd4] sm:$0xf] %v1232
      %1361 = vst [vmem:[#allocation8 + $0xd8] sm:$0xf] %v1233
      %1362 = vst [vmem:[#allocation8 + $0xdc] sm:$0xf] %v1234
      %1363 = vst [vmem:[#allocation8 + $0xe0] sm:$0xf] %v1235
      %1364 = vst [vmem:[#allocation8 + $0xe4] sm:$0xf] %v1236
      %1365 = vst [vmem:[#allocation8 + $0xe8] sm:$0xf] %v1237
      %1366 = vst [vmem:[#allocation8 + $0xec] sm:$0xf] %v1238
      %1367 = vst [vmem:[#allocation8 + $0xf0] sm:$0xf] %v1239
      %1368 = vst [vmem:[#allocation8 + $0xf4] sm:$0xf] %v1240
      %1369 = vst [vmem:[#allocation8 + $0xf8] sm:$0xf] %v1241
      %1370 = vst [vmem:[#allocation8 + $0xfc] sm:$0xf] %v1242
    $region29: #{tpu_custom_call.1} parent=1 // pred_fallthru
      _
    // Predicated region
    $region30: #{tpu_custom_call.1} parent=1 // pred_check
      _
    $region31: #{tpu_custom_call.1} parent=1 // pred_check_branch
      %1372 = sbr.rel (0) target = $region33
    $region32: #{tpu_custom_call.1} parent=1 // pred_region
      %s1374 = ssub.s32 4096, 4096
      %1375 = vsyncadd [#allocation5], %s1374
      %s1376 = sshll.u32 [#allocation8], 4
      %s1377 = int_to_ptr.vmem [resolvable:$true] %s1376
      %1382 = dma.vmem_to_hbm [thread:$0]  %s1377, 4096, %s3, [#allocation5], 64, 64, 4
    $region33: #{tpu_custom_call.1} parent=1 // pred_fallthru
      _
    // Predicated region
    $region34: #{tpu_custom_call.1} parent=1 // pred_check
      _
    $region35: #{tpu_custom_call.1} parent=1 // pred_check_branch
      %1384 = sbr.rel (0) target = $region37
    $region36: #{tpu_custom_call.1} parent=1 // pred_region
      %1385 = dma.done [#allocation5], 4096
    $region37: #{tpu_custom_call.1} parent=1 // pred_fallthru
      _
    %1386 = vsyncpa [#allocation4], 1
    %1387 = vsyncpa [#allocation7], 1
    %1388 = vsyncpa [#allocation5], 1

</llo_original>
